<compile_context>
chip_gen: v6e
topology: v6e:2x2x1
jax: 0.10.0
libtpu: 0.0.40
codegen_flags: <defaults>
</compile_context>

<pallas_src>
import functools

import numpy as np
import jax
import jax.numpy as jnp
from jax.experimental import pallas as pl
from jax.experimental.pallas import tpu as pltpu


# ----------------------------------------------------------------------------
# Static helpers
# ----------------------------------------------------------------------------
def _round_up(a, b):
    return (a + b - 1) // b * b


def _rotation_perm(H, D):
    """perm/sign implement q2 = stack([-Q[...,1::2], Q[...,::2]], dim=2).reshape(...)"""
    HD = H * D
    perm = np.zeros(HD, np.int32)
    sign = np.zeros(HD, np.float32)
    for h in range(H):
        for j in range(D):
            m = h * D + j
            if j < D // 2:
                perm[m] = h * D + 2 * j + 1
                sign[m] = -1.0
            else:
                perm[m] = h * D + 2 * (j - D // 2)
                sign[m] = 1.0
    return perm, sign


def _vmem_limit_bytes():
    """Generation-aware VMEM budget (64 MiB on v7x, 128 MiB on v5e/v6e)."""
    try:
        info = pltpu.get_tpu_info()
        cap = getattr(info, "vmem_capacity_bytes", None) or getattr(info, "vmem_bytes", None)
        if cap:
            return int(min(0.75 * cap, 100 * 1024 * 1024))
    except Exception:
        pass
    return 48 * 1024 * 1024


# ----------------------------------------------------------------------------
# Pallas kernel (grid over edge tiles)
# ----------------------------------------------------------------------------
def _grit_edge_kernel(HD, N_pad, clamp,
                      x_ref, ang_ref, src_ref, dst_ref, ea_ref,
                      wq_ref, wq2_ref, wk_ref, wk2_ref, wv_ref,
                      theta_ref, wew_ref, werep_ref, hh_ref, ve0_ref,
                      wv_out_ref, we_out_ref,
                      nq_ref, nkv_ref, acc_ref):
    f32, bf16 = jnp.float32, jnp.bfloat16
    mm = lambda a, b: jnp.dot(a, b, preferred_element_type=f32)
    step = pl.program_id(0)

    # ---- Node phase: hoisted out of the edge loop, runs once on the first tile ----
    @pl.when(step == 0)
    def _node_phase():
        x = x_ref[...]                                    # [N_pad, F+1] (ones col = bias)
        theta = mm(ang_ref[...], theta_ref[...])          # softmax(S) + repeat(2) folded in
        cosp, sinp = jnp.cos(theta), jnp.sin(theta)
        # Separate per-segment matmuls (HD < 128 => no lane-misaligned slices).
        q_rot = mm(x, wq_ref[...]) * cosp + mm(x, wq2_ref[...]) * sinp   # D^-0.5 folded in
        k_rot = mm(x, wk_ref[...]) * cosp + mm(x, wk2_ref[...]) * sinp
        v = mm(x, wv_ref[...])
        nq_ref[...] = q_rot.astype(bf16)                               # resident [N, HD]
        nkv_ref[...] = jnp.concatenate([k_rot, v], axis=1).astype(bf16)  # resident [N, 2HD]
        acc_ref[...] = jnp.zeros_like(acc_ref)                         # [N, 3HD] f32

    # ---- Edge phase (per tile) ----
    src = src_ref[...]                                    # [TE, 1] int32
    dst = dst_ref[...]                                    # [TE, 1] int32
    TE = src.shape[0]
    iota = jax.lax.broadcasted_iota(jnp.int32, (TE, N_pad), 1)
    # On-the-fly one-hots (padded edges carry index == N_pad -> all-zero rows).
    src_oh = jnp.where(iota == src, 1.0, 0.0).astype(bf16)             # [TE, N]
    dst_oh = jnp.where(iota == dst, 1.0, 0.0).astype(bf16)             # [TE, N]

    # Fused gathers: one src sweep for [k_rot | v], one dst sweep for q_rot.
    kv_src = mm(src_oh, nkv_ref[...])                    # [TE, 2HD] f32
    q_dst = mm(dst_oh, nq_ref[...])                      # [TE, HD]
    k_src = kv_src[:, 0:HD]
    v_src = kv_src[:, HD:2 * HD]

    # Edge projections (bias folded via ones column); E is already replicated to HD width.
    ea = ea_ref[...]                                     # [TE, F+1]
    ew = mm(ea, wew_ref[...])                            # [TE, HD]
    e_rep = mm(ea, werep_ref[...])                       # [TE, HD]

    # Per-head dot product, kept lane-dense at HD width via block-diagonal ones matmul.
    score = mm(k_src * q_dst, hh_ref[...]) + e_rep       # [TE, HD]
    e_t = score                                          # pre-clamp score (edge enhance)
    score_c = jnp.clip(score, -clamp, clamp)
    we_out_ref[...] = ew * score_c                       # wE for this edge tile

    # Grouped softmax numerator: |score_c| <= clamp, so exp(score_c - clamp) <= 1 and the
    # scatter-max of pyg_softmax is unnecessary (shift-invariant).
    p = jnp.exp(score_c - clamp)                         # [TE, HD] f32

    # ONE fused scatter-add over the destination nodes: [den | wV_num | r_num].
    vals = jnp.concatenate([p, v_src * p, e_t * p], axis=1).astype(bf16)   # [TE, 3HD]
    acc_ref[...] += jax.lax.dot_general(
        dst_oh, vals, (((0,), (0,)), ((), ())), preferred_element_type=f32)

    # ---- Finalize on the last tile: divide by per-node denominator, add edge enhance ----
    @pl.when(step == pl.num_programs(0) - 1)
    def _finalize():
        acc = acc_ref[...]
        den = acc[:, 0:HD]
        wv_num = acc[:, HD:2 * HD]
        r_num = acc[:, 2 * HD:3 * HD]
        inv = 1.0 / (den + 1e-16)                        # exact (once per node)
        # Edge enhance: torch scatters [E,H,1] -> only VeRow[0] contributes.
        wv_out_ref[...] = (wv_num + r_num * ve0_ref[...]) * inv


# ----------------------------------------------------------------------------
# Wrapper (weight folding, padding, grid/BlockSpec setup)
# ----------------------------------------------------------------------------
def grit_attention_pallas(x, edge_attr, angles, edge_index, params,
                          num_heads, out_dim, clamp=5.0, edge_tile=128):
    f32, i32 = jnp.float32, jnp.int32
    N, F = x.shape
    Eg = edge_attr.shape[0]
    A = angles.shape[1]
    H, D = num_heads, out_dim
    HD = H * D
    clamp = float(abs(clamp))

    # Padding: nodes to a multiple of 8 sublanes, edges to a multiple of the tile.
    N_pad = _round_up(N, 8)
    TE = _round_up(max(8, min(edge_tile, _round_up(Eg, 8))), 8)
    E_pad = _round_up(Eg, TE)

    perm, sign = _rotation_perm(H, D)
    scale = float(D) ** -0.5

    def fold_bias(w, b):                                  # [F,O],[1,O] -> [F+1,O]
        return jnp.concatenate([w, b.reshape(1, -1)], axis=0).astype(f32)

    # Fold the 1/sqrt(D) scale into Q, and the signed even/odd permutation into q2/k2.
    wq_s, bq_s = params["Wq"] * scale, params["bq"] * scale
    wq2, bq2 = wq_s[:, perm] * sign[None, :], bq_s[:, perm] * sign[None, :]
    wk2, bk2 = params["Wk"][:, perm] * sign[None, :], params["bk"][:, perm] * sign[None, :]

    wq_a = fold_bias(wq_s, bq_s)
    wq2_a = fold_bias(wq2, bq2)
    wk_a = fold_bias(params["Wk"], params["bk"])
    wk2_a = fold_bias(wk2, bk2)
    wv_a = fold_bias(params["Wv"], params["bv"])
    wew_a = fold_bias(params["Wew"], params["bew"])
    # E projection replicated D-per-head so the score stays lane-dense at HD width.
    we_rep_a = fold_bias(jnp.repeat(params["We"], D, axis=1),
                         jnp.repeat(params["be"], D, axis=1))
    # softmax(S) and repeat_interleave(2) folded into one [A, HD] matrix.
    theta_proj = jnp.repeat(jax.nn.softmax(params["S"], axis=1), 2, axis=1).astype(f32)
    # Block-diagonal ones: per-head sum broadcast back over the head's D lanes.
    hh = jnp.asarray(np.kron(np.eye(H, dtype=np.float32), np.ones((D, D), np.float32)))
    ve0 = params["VeRow"][0].reshape(1, HD).astype(f32)   # only VeRow[0] contributes

    # Augmented (ones column = bias) and padded activations.
    x_aug = jnp.concatenate([x.astype(f32), jnp.ones((N, 1), f32)], axis=1)
    x_aug = jnp.pad(x_aug, ((0, N_pad - N), (0, 0)))
    ang_p = jnp.pad(angles.astype(f32), ((0, N_pad - N), (0, 0)))
    ea_aug = jnp.concatenate([edge_attr.astype(f32), jnp.ones((Eg, 1), f32)], axis=1)
    ea_aug = jnp.pad(ea_aug, ((0, E_pad - Eg), (0, 0)))
    # Padded edges point at node N_pad (out of range) -> all-zero one-hot rows.
    src = jnp.pad(edge_index[0].astype(i32), (0, E_pad - Eg),
                  constant_values=N_pad).reshape(E_pad, 1)
    dst = jnp.pad(edge_index[1].astype(i32), (0, E_pad - Eg),
                  constant_values=N_pad).reshape(E_pad, 1)

    Fa = F + 1
    grid = (E_pad // TE,)
    const = lambda shape: pl.BlockSpec(shape, lambda e: (0, 0))
    etile = lambda shape: pl.BlockSpec(shape, lambda e: (e, 0))

    kernel = functools.partial(_grit_edge_kernel, HD, N_pad, clamp)

    wv_flat, we_flat = pl.pallas_call(
        kernel,
        out_shape=(jax.ShapeDtypeStruct((N_pad, HD), f32),
                   jax.ShapeDtypeStruct((E_pad, HD), f32)),
        grid_spec=pltpu.PrefetchScalarGridSpec(
            num_scalar_prefetch=0,
            grid=grid,
            in_specs=[
                const((N_pad, Fa)),    # x (ones-augmented), resident
                const((N_pad, A)),     # node rotation angles, resident
                etile((TE, 1)),        # src indices, per edge tile
                etile((TE, 1)),        # dst indices, per edge tile
                etile((TE, Fa)),       # edge_attr (ones-augmented), per edge tile
                const((Fa, HD)),       # Wq (scaled, bias folded)
                const((Fa, HD)),       # Wq2 (signed perm, scaled)
                const((Fa, HD)),       # Wk
                const((Fa, HD)),       # Wk2
                const((Fa, HD)),       # Wv
                const((A, HD)),        # theta projection
                const((Fa, HD)),       # Wew
                const((Fa, HD)),       # We replicated to HD width
                const((HD, HD)),       # per-head block-diagonal ones
                const((1, HD)),        # VeRow[0] flattened
            ],
            out_specs=[
                pl.BlockSpec((N_pad, HD), lambda e: (0, 0)),   # wV: resident across edge axis
                pl.BlockSpec((TE, HD), lambda e: (e, 0)),      # wE: per edge tile
            ],
            scratch_shapes=[
                pltpu.VMEM((N_pad, HD), jnp.bfloat16),      # q_rot (resident)
                pltpu.VMEM((N_pad, 2 * HD), jnp.bfloat16),  # [k_rot | v] (resident)
                pltpu.VMEM((N_pad, 3 * HD), jnp.float32),   # [den | wV_num | r_num]
            ],
        ),
        compiler_params=pltpu.CompilerParams(
            dimension_semantics=("arbitrary",),
            vmem_limit_bytes=_vmem_limit_bytes(),
        ),
    )(x_aug, ang_p, src, dst, ea_aug,
      wq_a, wq2_a, wk_a, wk2_a, wv_a, theta_proj, wew_a, we_rep_a, hh, ve0)

    return wv_flat[:N].reshape(N, H, D), we_flat[:Eg].reshape(Eg, H, D)


# ----------------------------------------------------------------------------
# Pure-JAX reference (mirrors the PyTorch forward exactly)
# ----------------------------------------------------------------------------
def grit_attention_reference(x, edge_attr, angles, edge_index, params,
                             num_heads, out_dim, clamp=5.0):
    N = x.shape[0]
    Eg = edge_attr.shape[0]
    H, D = num_heads, out_dim

    Q = (x @ params["Wq"] + params["bq"]).reshape(N, H, D)
    K = (x @ params["Wk"] + params["bk"]).reshape(N, H, D)
    V = (x @ params["Wv"] + params["bv"]).reshape(N, H, D)
    E = edge_attr @ params["We"] + params["be"]                    # [E, H]
    Ew = (edge_attr @ params["Wew"] + params["bew"]).reshape(Eg, H, D)

    Ssm = jax.nn.softmax(params["S"], axis=1)
    theta = jnp.repeat(angles @ Ssm, 2, axis=1).reshape(N, H, D)
    cosp, sinp = jnp.cos(theta), jnp.sin(theta)
    q2 = jnp.stack([-Q[..., 1::2], Q[..., ::2]], axis=2).reshape(Q.shape)
    k2 = jnp.stack([-K[..., 1::2], K[..., ::2]], axis=2).reshape(K.shape)
    Q = Q * cosp + q2 * sinp
    K = K * cosp + k2 * sinp

    s_idx, d_idx = edge_index[0], edge_index[1]
    score = jnp.sum(K[s_idx] * Q[d_idx], axis=2) / (D ** 0.5)      # [E, H]
    score = score + E
    e_t = score
    score = jnp.clip(score, -clamp, clamp)
    wE = Ew * score[:, :, None]

    smax = jax.ops.segment_max(score, d_idx, num_segments=N)
    out = jnp.exp(score - smax[d_idx])
    ssum = jax.ops.segment_sum(out, d_idx, num_segments=N)
    attn = out / (ssum[d_idx] + 1e-16)

    wV = jax.ops.segment_sum(V[s_idx] * attn[:, :, None], d_idx, num_segments=N)
    r = jax.ops.segment_sum(e_t * attn, d_idx, num_segments=N)     # [N, H]
    wV = wV + r[:, :, None] * params["VeRow"][0][None, :, :]       # torch writes only channel 0
    return wV, wE


# ----------------------------------------------------------------------------
if __name__ == "__main__":
    N, F, H, D, A, Eg = 16, 32, 4, 8, 2, 48      # nodes, in_dim, heads, out_dim, angles, edges
    HD, HD2 = H * D, (H * D) // 2

    key = jax.random.PRNGKey(0)
    ks = jax.random.split(key, 20)

    def xavier(k, fan_in, fan_out, shape):
        std = (2.0 / (fan_in + fan_out)) ** 0.5
        return std * jax.random.normal(k, shape, jnp.float32)

    params = {
        "Wq": xavier(ks[0], F, HD, (F, HD)),
        "bq": 0.01 * jax.random.normal(ks[1], (1, HD), jnp.float32),
        "Wk": xavier(ks[2], F, HD, (F, HD)),
        "bk": 0.01 * jax.random.normal(ks[3], (1, HD), jnp.float32),
        "Wv": xavier(ks[4], F, HD, (F, HD)),
        "bv": 0.01 * jax.random.normal(ks[5], (1, HD), jnp.float32),
        "We": xavier(ks[6], F, H, (F, H)),
        "be": 0.01 * jax.random.normal(ks[7], (1, H), jnp.float32),
        "Wew": xavier(ks[8], F, HD, (F, HD)),
        "bew": 0.01 * jax.random.normal(ks[9], (1, HD), jnp.float32),
        "S": xavier(ks[10], A, HD2, (A, HD2)),
        "VeRow": xavier(ks[11], H * D, D, (D, H, D)),
    }

    x = jax.random.normal(ks[12], (N, F), jnp.float32)
    edge_attr = jax.random.normal(ks[13], (Eg, F), jnp.float32)
    angles = jax.random.normal(ks[14], (N, A), jnp.float32)      # node_rotation_angles
    src_idx = jax.random.randint(ks[15], (Eg,), 0, N)
    dst_idx = jax.random.randint(ks[16], (Eg,), 0, N)
    edge_index = jnp.stack([src_idx, dst_idx], axis=0)

    # edge_tile=16 -> a 3-step edge grid on the toy graph (exercises the resident
    # accumulator / init / finalize path).
    h_out, e_out = grit_attention_pallas(x, edge_attr, angles, edge_index, params,
                                         H, D, edge_tile=16)
    jax.block_until_ready((h_out, e_out))

    with jax.default_matmul_precision("highest"):
        h_ref, e_ref = grit_attention_reference(x, edge_attr, angles, edge_index, params, H, D)
        h_ref, e_ref = jax.block_until_ready((h_ref, e_ref))

    np.testing.assert_allclose(np.asarray(h_out), np.asarray(h_ref), rtol=5e-2, atol=5e-2)
    np.testing.assert_allclose(np.asarray(e_out), np.asarray(e_ref), rtol=5e-2, atol=5e-2)
    print("KERNEL_OK")
</pallas_src>

<mosaic_0001>
module attributes {stable_mosaic.version = 11 : i64} {
  func.func @_grit_edge_kernel(%arg0: i32, %arg1: memref<16x33xf32, #tpu.memory_space<vmem>>, %arg2: memref<16x2xf32, #tpu.memory_space<vmem>>, %arg3: memref<16x1xi32, #tpu.memory_space<vmem>>, %arg4: memref<16x1xi32, #tpu.memory_space<vmem>>, %arg5: memref<16x33xf32, #tpu.memory_space<vmem>>, %arg6: memref<33x32xf32, #tpu.memory_space<vmem>>, %arg7: memref<33x32xf32, #tpu.memory_space<vmem>>, %arg8: memref<33x32xf32, #tpu.memory_space<vmem>>, %arg9: memref<33x32xf32, #tpu.memory_space<vmem>>, %arg10: memref<33x32xf32, #tpu.memory_space<vmem>>, %arg11: memref<2x32xf32, #tpu.memory_space<vmem>>, %arg12: memref<33x32xf32, #tpu.memory_space<vmem>>, %arg13: memref<33x32xf32, #tpu.memory_space<vmem>>, %arg14: memref<32x32xf32, #tpu.memory_space<vmem>>, %arg15: memref<1x32xf32, #tpu.memory_space<vmem>>, %arg16: memref<16x32xf32, #tpu.memory_space<vmem>>, %arg17: memref<16x32xf32, #tpu.memory_space<vmem>>, %arg18: memref<16x32xbf16, #tpu.memory_space<vmem>>, %arg19: memref<16x64xbf16, #tpu.memory_space<vmem>>, %arg20: memref<16x96xf32, #tpu.memory_space<vmem>>) attributes {dimension_semantics = [#tpu.dimension_semantics<arbitrary>], iteration_bounds = array<i64: 3>, scalar_prefetch = 0 : i64, scratch_operands = 3 : i64, tpu.core_type = #tpu.core_type<tc>, window_params = [{pipeline_mode = #tpu.pipeline_mode<synchronous>, transform_indices = @transform_0, window_bounds = array<i64: 16, 33>}, {pipeline_mode = #tpu.pipeline_mode<synchronous>, transform_indices = @transform_1, window_bounds = array<i64: 16, 2>}, {transform_indices = @transform_2, window_bounds = array<i64: 16, 1>}, {transform_indices = @transform_3, window_bounds = array<i64: 16, 1>}, {transform_indices = @transform_4, window_bounds = array<i64: 16, 33>}, {pipeline_mode = #tpu.pipeline_mode<synchronous>, transform_indices = @transform_5, window_bounds = array<i64: 33, 32>}, {pipeline_mode = #tpu.pipeline_mode<synchronous>, transform_indices = @transform_6, window_bounds = array<i64: 33, 32>}, {pipeline_mode = #tpu.pipeline_mode<synchronous>, transform_indices = @transform_7, window_bounds = array<i64: 33, 32>}, {pipeline_mode = #tpu.pipeline_mode<synchronous>, transform_indices = @transform_8, window_bounds = array<i64: 33, 32>}, {pipeline_mode = #tpu.pipeline_mode<synchronous>, transform_indices = @transform_9, window_bounds = array<i64: 33, 32>}, {pipeline_mode = #tpu.pipeline_mode<synchronous>, transform_indices = @transform_10, window_bounds = array<i64: 2, 32>}, {pipeline_mode = #tpu.pipeline_mode<synchronous>, transform_indices = @transform_11, window_bounds = array<i64: 33, 32>}, {pipeline_mode = #tpu.pipeline_mode<synchronous>, transform_indices = @transform_12, window_bounds = array<i64: 33, 32>}, {pipeline_mode = #tpu.pipeline_mode<synchronous>, transform_indices = @transform_13, window_bounds = array<i64: 32, 32>}, {pipeline_mode = #tpu.pipeline_mode<synchronous>, transform_indices = @transform_14, window_bounds = array<i64: 1, 32>}, {pipeline_mode = #tpu.pipeline_mode<synchronous>, transform_indices = @transform_15, window_bounds = array<i64: 16, 32>}, {transform_indices = @transform_16, window_bounds = array<i64: 16, 32>}]} {
    %c0_i32 = arith.constant 0 : i32
    %0 = arith.cmpi eq, %arg0, %c0_i32 : i32
    %1 = arith.extui %0 : i1 to i32
    %c0_i32_0 = arith.constant 0 : i32
    %2 = arith.cmpi ne, %1, %c0_i32_0 : i32
    scf.if %2 {
      %c0_35 = arith.constant 0 : index
      %c0_36 = arith.constant 0 : index
      %53 = vector.load %arg1[%c0_35, %c0_36] : memref<16x33xf32, #tpu.memory_space<vmem>>, vector<16x33xf32>
      %c0_37 = arith.constant 0 : index
      %c0_38 = arith.constant 0 : index
      %54 = vector.load %arg2[%c0_37, %c0_38] : memref<16x2xf32, #tpu.memory_space<vmem>>, vector<16x2xf32>
      %c0_39 = arith.constant 0 : index
      %c0_40 = arith.constant 0 : index
      %55 = vector.load %arg11[%c0_39, %c0_40] : memref<2x32xf32, #tpu.memory_space<vmem>>, vector<2x32xf32>
      %cst_41 = arith.constant dense<0.000000e+00> : vector<16x32xf32>
      %56 = tpu.matmul %54, %55, %cst_41 {dimension_numbers = #tpu.dot_dimension_numbers<[1], [0], [0], [1], [0, 0, 1, 1], [], []>} : vector<16x2xf32>, vector<2x32xf32>, vector<16x32xf32> -> vector<16x32xf32>
      %57 = math.cos %56 : vector<16x32xf32>
      %58 = math.sin %56 : vector<16x32xf32>
      %c0_42 = arith.constant 0 : index
      %c0_43 = arith.constant 0 : index
      %59 = vector.load %arg6[%c0_42, %c0_43] : memref<33x32xf32, #tpu.memory_space<vmem>>, vector<33x32xf32>
      %cst_44 = arith.constant dense<0.000000e+00> : vector<16x32xf32>
      %60 = tpu.matmul %53, %59, %cst_44 {dimension_numbers = #tpu.dot_dimension_numbers<[1], [0], [0], [1], [0, 0, 1, 1], [], []>} : vector<16x33xf32>, vector<33x32xf32>, vector<16x32xf32> -> vector<16x32xf32>
      %61 = arith.mulf %60, %57 : vector<16x32xf32>
      %c0_45 = arith.constant 0 : index
      %c0_46 = arith.constant 0 : index
      %62 = vector.load %arg7[%c0_45, %c0_46] : memref<33x32xf32, #tpu.memory_space<vmem>>, vector<33x32xf32>
      %cst_47 = arith.constant dense<0.000000e+00> : vector<16x32xf32>
      %63 = tpu.matmul %53, %62, %cst_47 {dimension_numbers = #tpu.dot_dimension_numbers<[1], [0], [0], [1], [0, 0, 1, 1], [], []>} : vector<16x33xf32>, vector<33x32xf32>, vector<16x32xf32> -> vector<16x32xf32>
      %64 = arith.mulf %63, %58 : vector<16x32xf32>
      %65 = arith.addf %61, %64 : vector<16x32xf32>
      %c0_48 = arith.constant 0 : index
      %c0_49 = arith.constant 0 : index
      %66 = vector.load %arg8[%c0_48, %c0_49] : memref<33x32xf32, #tpu.memory_space<vmem>>, vector<33x32xf32>
      %cst_50 = arith.constant dense<0.000000e+00> : vector<16x32xf32>
      %67 = tpu.matmul %53, %66, %cst_50 {dimension_numbers = #tpu.dot_dimension_numbers<[1], [0], [0], [1], [0, 0, 1, 1], [], []>} : vector<16x33xf32>, vector<33x32xf32>, vector<16x32xf32> -> vector<16x32xf32>
      %68 = arith.mulf %67, %57 : vector<16x32xf32>
      %c0_51 = arith.constant 0 : index
      %c0_52 = arith.constant 0 : index
      %69 = vector.load %arg9[%c0_51, %c0_52] : memref<33x32xf32, #tpu.memory_space<vmem>>, vector<33x32xf32>
      %cst_53 = arith.constant dense<0.000000e+00> : vector<16x32xf32>
      %70 = tpu.matmul %53, %69, %cst_53 {dimension_numbers = #tpu.dot_dimension_numbers<[1], [0], [0], [1], [0, 0, 1, 1], [], []>} : vector<16x33xf32>, vector<33x32xf32>, vector<16x32xf32> -> vector<16x32xf32>
      %71 = arith.mulf %70, %58 : vector<16x32xf32>
      %72 = arith.addf %68, %71 : vector<16x32xf32>
      %c0_54 = arith.constant 0 : index
      %c0_55 = arith.constant 0 : index
      %73 = vector.load %arg10[%c0_54, %c0_55] : memref<33x32xf32, #tpu.memory_space<vmem>>, vector<33x32xf32>
      %cst_56 = arith.constant dense<0.000000e+00> : vector<16x32xf32>
      %74 = tpu.matmul %53, %73, %cst_56 {dimension_numbers = #tpu.dot_dimension_numbers<[1], [0], [0], [1], [0, 0, 1, 1], [], []>} : vector<16x33xf32>, vector<33x32xf32>, vector<16x32xf32> -> vector<16x32xf32>
      %75 = arith.truncf %65 : vector<16x32xf32> to vector<16x32xbf16>
      %c0_57 = arith.constant 0 : index
      %c0_58 = arith.constant 0 : index
      %76 = vector.load %arg18[%c0_57, %c0_58] : memref<16x32xbf16, #tpu.memory_space<vmem>>, vector<16x32xbf16>
      tpu.vector_store %arg18[%c0_57, %c0_58], %75 {strides = array<i32>} : memref<16x32xbf16, #tpu.memory_space<vmem>>, vector<16x32xbf16>,
      %77 = tpu.concatenate %72, %74 in 1 : vector<16x32xf32>, vector<16x32xf32> -> vector<16x64xf32>
      %78 = arith.truncf %77 : vector<16x64xf32> to vector<16x64xbf16>
      %c0_59 = arith.constant 0 : index
      %c0_60 = arith.constant 0 : index
      %79 = vector.load %arg19[%c0_59, %c0_60] : memref<16x64xbf16, #tpu.memory_space<vmem>>, vector<16x64xbf16>
      tpu.vector_store %arg19[%c0_59, %c0_60], %78 {strides = array<i32>} : memref<16x64xbf16, #tpu.memory_space<vmem>>, vector<16x64xbf16>,
      %cst_61 = arith.constant 0.000000e+00 : f32
      %80 = vector.broadcast %cst_61 : f32 to vector<16x96xf32>
      %c0_62 = arith.constant 0 : index
      %c0_63 = arith.constant 0 : index
      %81 = vector.load %arg20[%c0_62, %c0_63] : memref<16x96xf32, #tpu.memory_space<vmem>>, vector<16x96xf32>
      tpu.vector_store %arg20[%c0_62, %c0_63], %80 {strides = array<i32>} : memref<16x96xf32, #tpu.memory_space<vmem>>, vector<16x96xf32>,
    } else {
    }
    %c0 = arith.constant 0 : index
    %c0_1 = arith.constant 0 : index
    %3 = vector.load %arg3[%c0, %c0_1] : memref<16x1xi32, #tpu.memory_space<vmem>>, vector<16x1xi32>
    %c0_2 = arith.constant 0 : index
    %c0_3 = arith.constant 0 : index
    %4 = vector.load %arg4[%c0_2, %c0_3] : memref<16x1xi32, #tpu.memory_space<vmem>>, vector<16x1xi32>
    %5 = tpu.iota {dimensions = array<i32: 1>} : vector<16x16xi32>
    %6 = vector.broadcast %3 : vector<16x1xi32> to vector<16x16xi32>
    %7 = arith.cmpi eq, %5, %6 : vector<16x16xi32>
    %cst = arith.constant 1.000000e+00 : f32
    %cst_4 = arith.constant 0.000000e+00 : f32
    %8 = vector.broadcast %cst : f32 to vector<16x16xf32>
    %9 = vector.broadcast %cst_4 : f32 to vector<16x16xf32>
    %10 = arith.select %7, %8, %9 : vector<16x16xi1>, vector<16x16xf32>
    %11 = arith.truncf %10 : vector<16x16xf32> to vector<16x16xbf16>
    %12 = vector.broadcast %4 : vector<16x1xi32> to vector<16x16xi32>
    %13 = arith.cmpi eq, %5, %12 : vector<16x16xi32>
    %cst_5 = arith.constant 1.000000e+00 : f32
    %cst_6 = arith.constant 0.000000e+00 : f32
    %14 = vector.broadcast %cst_5 : f32 to vector<16x16xf32>
    %15 = vector.broadcast %cst_6 : f32 to vector<16x16xf32>
    %16 = arith.select %13, %14, %15 : vector<16x16xi1>, vector<16x16xf32>
    %17 = arith.truncf %16 : vector<16x16xf32> to vector<16x16xbf16>
    %c0_7 = arith.constant 0 : index
    %c0_8 = arith.constant 0 : index
    %18 = vector.load %arg19[%c0_7, %c0_8] : memref<16x64xbf16, #tpu.memory_space<vmem>>, vector<16x64xbf16>
    %cst_9 = arith.constant dense<0.000000e+00> : vector<16x64xf32>
    %19 = tpu.matmul %11, %18, %cst_9 {dimension_numbers = #tpu.dot_dimension_numbers<[1], [0], [0], [1], [0, 0, 1, 1], [], []>} : vector<16x16xbf16>, vector<16x64xbf16>, vector<16x64xf32> -> vector<16x64xf32>
    %c0_10 = arith.constant 0 : index
    %c0_11 = arith.constant 0 : index
    %20 = vector.load %arg18[%c0_10, %c0_11] : memref<16x32xbf16, #tpu.memory_space<vmem>>, vector<16x32xbf16>
    %cst_12 = arith.constant dense<0.000000e+00> : vector<16x32xf32>
    %21 = tpu.matmul %17, %20, %cst_12 {dimension_numbers = #tpu.dot_dimension_numbers<[1], [0], [0], [1], [0, 0, 1, 1], [], []>} : vector<16x16xbf16>, vector<16x32xbf16>, vector<16x32xf32> -> vector<16x32xf32>
    %22 = vector.extract_strided_slice %19 {offsets = [0, 0], sizes = [16, 32], strides = [1, 1]} : vector<16x64xf32> to vector<16x32xf32>
    %23 = vector.extract_strided_slice %19 {offsets = [0, 32], sizes = [16, 32], strides = [1, 1]} : vector<16x64xf32> to vector<16x32xf32>
    %c0_13 = arith.constant 0 : index
    %c0_14 = arith.constant 0 : index
    %24 = vector.load %arg5[%c0_13, %c0_14] : memref<16x33xf32, #tpu.memory_space<vmem>>, vector<16x33xf32>
    %c0_15 = arith.constant 0 : index
    %c0_16 = arith.constant 0 : index
    %25 = vector.load %arg12[%c0_15, %c0_16] : memref<33x32xf32, #tpu.memory_space<vmem>>, vector<33x32xf32>
    %cst_17 = arith.constant dense<0.000000e+00> : vector<16x32xf32>
    %26 = tpu.matmul %24, %25, %cst_17 {dimension_numbers = #tpu.dot_dimension_numbers<[1], [0], [0], [1], [0, 0, 1, 1], [], []>} : vector<16x33xf32>, vector<33x32xf32>, vector<16x32xf32> -> vector<16x32xf32>
    %c0_18 = arith.constant 0 : index
    %c0_19 = arith.constant 0 : index
    %27 = vector.load %arg13[%c0_18, %c0_19] : memref<33x32xf32, #tpu.memory_space<vmem>>, vector<33x32xf32>
    %cst_20 = arith.constant dense<0.000000e+00> : vector<16x32xf32>
    %28 = tpu.matmul %24, %27, %cst_20 {dimension_numbers = #tpu.dot_dimension_numbers<[1], [0], [0], [1], [0, 0, 1, 1], [], []>} : vector<16x33xf32>, vector<33x32xf32>, vector<16x32xf32> -> vector<16x32xf32>
    %29 = arith.mulf %22, %21 : vector<16x32xf32>
    %c0_21 = arith.constant 0 : index
    %c0_22 = arith.constant 0 : index
    %30 = vector.load %arg14[%c0_21, %c0_22] : memref<32x32xf32, #tpu.memory_space<vmem>>, vector<32x32xf32>
    %cst_23 = arith.constant dense<0.000000e+00> : vector<16x32xf32>
    %31 = tpu.matmul %29, %30, %cst_23 {dimension_numbers = #tpu.dot_dimension_numbers<[1], [0], [0], [1], [0, 0, 1, 1], [], []>} : vector<16x32xf32>, vector<32x32xf32>, vector<16x32xf32> -> vector<16x32xf32>
    %32 = arith.addf %31, %28 : vector<16x32xf32>
    %cst_24 = arith.constant -5.000000e+00 : f32
    %cst_25 = arith.constant 5.000000e+00 : f32
    %33 = vector.broadcast %cst_24 : f32 to vector<16x32xf32>
    %34 = arith.maximumf %33, %32 : vector<16x32xf32>
    %35 = vector.broadcast %cst_25 : f32 to vector<16x32xf32>
    %36 = arith.minimumf %35, %34 : vector<16x32xf32>
    %37 = arith.mulf %26, %36 : vector<16x32xf32>
    %c0_26 = arith.constant 0 : index
    %c0_27 = arith.constant 0 : index
    %38 = vector.load %arg17[%c0_26, %c0_27] : memref<16x32xf32, #tpu.memory_space<vmem>>, vector<16x32xf32>
    tpu.vector_store %arg17[%c0_26, %c0_27], %37 {strides = array<i32>} : memref<16x32xf32, #tpu.memory_space<vmem>>, vector<16x32xf32>,
    %cst_28 = arith.constant 5.000000e+00 : f32
    %39 = vector.broadcast %cst_28 : f32 to vector<16x32xf32>
    %40 = arith.subf %36, %39 : vector<16x32xf32>
    %41 = math.exp %40 : vector<16x32xf32>
    %42 = arith.mulf %23, %41 : vector<16x32xf32>
    %43 = arith.mulf %32, %41 : vector<16x32xf32>
    %44 = tpu.concatenate %41, %42, %43 in 1 : vector<16x32xf32>, vector<16x32xf32>, vector<16x32xf32> -> vector<16x96xf32>
    %45 = arith.truncf %44 : vector<16x96xf32> to vector<16x96xbf16>
    %c0_29 = arith.constant 0 : index
    %c0_30 = arith.constant 0 : index
    %46 = vector.load %arg20[%c0_29, %c0_30] : memref<16x96xf32, #tpu.memory_space<vmem>>, vector<16x96xf32>
    %cst_31 = arith.constant dense<0.000000e+00> : vector<16x96xf32>
    %47 = tpu.matmul %17, %45, %cst_31 {dimension_numbers = #tpu.dot_dimension_numbers<[0], [0], [1], [1], [0, 1, 1, 1], [], []>} : vector<16x16xbf16>, vector<16x96xbf16>, vector<16x96xf32> -> vector<16x96xf32>
    %48 = arith.addf %46, %47 : vector<16x96xf32>
    %c0_32 = arith.constant 0 : index
    %c0_33 = arith.constant 0 : index
    %49 = vector.load %arg20[%c0_32, %c0_33] : memref<16x96xf32, #tpu.memory_space<vmem>>, vector<16x96xf32>
    tpu.vector_store %arg20[%c0_32, %c0_33], %48 {strides = array<i32>} : memref<16x96xf32, #tpu.memory_space<vmem>>, vector<16x96xf32>,
    %c2_i32 = arith.constant 2 : i32
    %50 = arith.cmpi eq, %arg0, %c2_i32 : i32
    %51 = arith.extui %50 : i1 to i32
    %c0_i32_34 = arith.constant 0 : i32
    %52 = arith.cmpi ne, %51, %c0_i32_34 : i32
    scf.if %52 {
      %c0_35 = arith.constant 0 : index
      %c0_36 = arith.constant 0 : index
      %53 = vector.load %arg20[%c0_35, %c0_36] : memref<16x96xf32, #tpu.memory_space<vmem>>, vector<16x96xf32>
      %54 = vector.extract_strided_slice %53 {offsets = [0, 0], sizes = [16, 32], strides = [1, 1]} : vector<16x96xf32> to vector<16x32xf32>
      %55 = vector.extract_strided_slice %53 {offsets = [0, 32], sizes = [16, 32], strides = [1, 1]} : vector<16x96xf32> to vector<16x32xf32>
      %56 = vector.extract_strided_slice %53 {offsets = [0, 64], sizes = [16, 32], strides = [1, 1]} : vector<16x96xf32> to vector<16x32xf32>
      %cst_37 = arith.constant 1.000000e-16 : f32
      %57 = vector.broadcast %cst_37 : f32 to vector<16x32xf32>
      %58 = arith.addf %54, %57 : vector<16x32xf32>
      %cst_38 = arith.constant 1.000000e+00 : f32
      %59 = vector.broadcast %cst_38 : f32 to vector<16x32xf32>
      %60 = arith.divf %59, %58 : vector<16x32xf32>
      %c0_39 = arith.constant 0 : index
      %c0_40 = arith.constant 0 : index
      %61 = vector.load %arg15[%c0_39, %c0_40] : memref<1x32xf32, #tpu.memory_space<vmem>>, vector<1x32xf32>
      %62 = vector.broadcast %61 : vector<1x32xf32> to vector<16x32xf32>
      %63 = arith.mulf %56, %62 : vector<16x32xf32>
      %64 = arith.addf %55, %63 : vector<16x32xf32>
      %65 = arith.mulf %64, %60 : vector<16x32xf32>
      %c0_41 = arith.constant 0 : index
      %c0_42 = arith.constant 0 : index
      %66 = vector.load %arg16[%c0_41, %c0_42] : memref<16x32xf32, #tpu.memory_space<vmem>>, vector<16x32xf32>
      tpu.vector_store %arg16[%c0_41, %c0_42], %65 {strides = array<i32>} : memref<16x32xf32, #tpu.memory_space<vmem>>, vector<16x32xf32>,
    } else {
    }
    return
  }
  func.func @transform_0(%arg0: i32) -> (i32, i32) {
    %c0_i32 = arith.constant 0 : i32
    %c0_i32_0 = arith.constant 0 : i32
    %c0_i32_1 = arith.constant 0 : i32
    return %c0_i32, %c0_i32_0 : i32, i32
  }
  func.func @transform_1(%arg0: i32) -> (i32, i32) {
    %c0_i32 = arith.constant 0 : i32
    %c0_i32_0 = arith.constant 0 : i32
    %c0_i32_1 = arith.constant 0 : i32
    return %c0_i32, %c0_i32_0 : i32, i32
  }
  func.func @transform_2(%arg0: i32) -> (i32, i32) {
    %c0_i32 = arith.constant 0 : i32
    %c0_i32_0 = arith.constant 0 : i32
    return %arg0, %c0_i32 : i32, i32
  }
  func.func @transform_3(%arg0: i32) -> (i32, i32) {
    %c0_i32 = arith.constant 0 : i32
    %c0_i32_0 = arith.constant 0 : i32
    return %arg0, %c0_i32 : i32, i32
  }
  func.func @transform_4(%arg0: i32) -> (i32, i32) {
    %c0_i32 = arith.constant 0 : i32
    %c0_i32_0 = arith.constant 0 : i32
    return %arg0, %c0_i32 : i32, i32
  }
  func.func @transform_5(%arg0: i32) -> (i32, i32) {
    %c0_i32 = arith.constant 0 : i32
    %c0_i32_0 = arith.constant 0 : i32
    %c0_i32_1 = arith.constant 0 : i32
    return %c0_i32, %c0_i32_0 : i32, i32
  }
  func.func @transform_6(%arg0: i32) -> (i32, i32) {
    %c0_i32 = arith.constant 0 : i32
    %c0_i32_0 = arith.constant 0 : i32
    %c0_i32_1 = arith.constant 0 : i32
    return %c0_i32, %c0_i32_0 : i32, i32
  }
  func.func @transform_7(%arg0: i32) -> (i32, i32) {
    %c0_i32 = arith.constant 0 : i32
    %c0_i32_0 = arith.constant 0 : i32
    %c0_i32_1 = arith.constant 0 : i32
    return %c0_i32, %c0_i32_0 : i32, i32
  }
  func.func @transform_8(%arg0: i32) -> (i32, i32) {
    %c0_i32 = arith.constant 0 : i32
    %c0_i32_0 = arith.constant 0 : i32
    %c0_i32_1 = arith.constant 0 : i32
    return %c0_i32, %c0_i32_0 : i32, i32
  }
  func.func @transform_9(%arg0: i32) -> (i32, i32) {
    %c0_i32 = arith.constant 0 : i32
    %c0_i32_0 = arith.constant 0 : i32
    %c0_i32_1 = arith.constant 0 : i32
    return %c0_i32, %c0_i32_0 : i32, i32
  }
  func.func @transform_10(%arg0: i32) -> (i32, i32) {
    %c0_i32 = arith.constant 0 : i32
    %c0_i32_0 = arith.constant 0 : i32
    %c0_i32_1 = arith.constant 0 : i32
    return %c0_i32, %c0_i32_0 : i32, i32
  }
  func.func @transform_11(%arg0: i32) -> (i32, i32) {
    %c0_i32 = arith.constant 0 : i32
    %c0_i32_0 = arith.constant 0 : i32
    %c0_i32_1 = arith.constant 0 : i32
    return %c0_i32, %c0_i32_0 : i32, i32
  }
  func.func @transform_12(%arg0: i32) -> (i32, i32) {
    %c0_i32 = arith.constant 0 : i32
    %c0_i32_0 = arith.constant 0 : i32
    %c0_i32_1 = arith.constant 0 : i32
    return %c0_i32, %c0_i32_0 : i32, i32
  }
  func.func @transform_13(%arg0: i32) -> (i32, i32) {
    %c0_i32 = arith.constant 0 : i32
    %c0_i32_0 = arith.constant 0 : i32
    %c0_i32_1 = arith.constant 0 : i32
    return %c0_i32, %c0_i32_0 : i32, i32
  }
  func.func @transform_14(%arg0: i32) -> (i32, i32) {
    %c0_i32 = arith.constant 0 : i32
    %c0_i32_0 = arith.constant 0 : i32
    %c0_i32_1 = arith.constant 0 : i32
    return %c0_i32, %c0_i32_0 : i32, i32
  }
  func.func @transform_15(%arg0: i32) -> (i32, i32) {
    %c0_i32 = arith.constant 0 : i32
    %c0_i32_0 = arith.constant 0 : i32
    %c0_i32_1 = arith.constant 0 : i32
    return %c0_i32, %c0_i32_0 : i32, i32
  }
  func.func @transform_16(%arg0: i32) -> (i32, i32) {
    %c0_i32 = arith.constant 0 : i32
    %c0_i32_0 = arith.constant 0 : i32
    return %arg0, %c0_i32 : i32, i32
  }
}

</mosaic_0001>

<llo_original>
// kernel: tpu_custom_call.1
$region0: #{tpu_custom_call.1}
  #allocation0 [shape = 'u32[]', space=smem, size = 0x4, offset = 0x4, fixed_abs, tag = 'smem constant byte address 0x4 - core index']
  #allocation1 [shape = 'u32[144,128]{1,0:T(1,128)}', space=vmem, size = 0x12000, scoped, tag = 'internal scratch']
  #allocation2 [shape = 'bf16[16,32]{1,0:T(8,128)(2,1)}', space=vmem, size = 0x1000, scoped, tag = 'scratch operand']
  #allocation3 [shape = 'bf16[16,64]{1,0:T(8,128)(2,1)}', space=vmem, size = 0x1000, scoped, tag = 'scratch operand']
  #allocation4 [shape = 'f32[16,96]{1,0:T(8,128)}', space=vmem, size = 0x2000, scoped, tag = 'scratch operand']
  %s0 = inlined_call_operand.vmem [shape: f32[16,33], index: 0, kind: input, shape index: {}]
  %s1 = inlined_call_operand.vmem [shape: f32[16,2], index: 1, kind: input, shape index: {}]
  %s2 = inlined_call_operand.vmem [shape: s32[48,1], index: 2, kind: input, shape index: {}]
  %s3 = inlined_call_operand.vmem [shape: s32[48,1], index: 3, kind: input, shape index: {}]
  %s4 = inlined_call_operand.vmem [shape: f32[48,33], index: 4, kind: input, shape index: {}]
  %s5 = inlined_call_operand.vmem [shape: f32[33,32], index: 5, kind: input, shape index: {}]
  %s6 = inlined_call_operand.vmem [shape: f32[33,32], index: 6, kind: input, shape index: {}]
  %s7 = inlined_call_operand.vmem [shape: f32[33,32], index: 7, kind: input, shape index: {}]
  %s8 = inlined_call_operand.vmem [shape: f32[33,32], index: 8, kind: input, shape index: {}]
  %s9 = inlined_call_operand.vmem [shape: f32[33,32], index: 9, kind: input, shape index: {}]
  %s10 = inlined_call_operand.vmem [shape: f32[2,32], index: 10, kind: input, shape index: {}]
  %s11 = inlined_call_operand.vmem [shape: f32[33,32], index: 11, kind: input, shape index: {}]
  %s12 = inlined_call_operand.vmem [shape: f32[33,32], index: 12, kind: input, shape index: {}]
  %s13 = inlined_call_operand.vmem [shape: f32[32,32], index: 13, kind: input, shape index: {}]
  %s14 = inlined_call_operand.vmem [shape: f32[1,32], index: 14, kind: input, shape index: {}]
  %s15 = inlined_call_operand.hbm [shape: f32[16,32], index: 15, kind: output, shape index: {0}]
  %s16 = inlined_call_operand.vmem [shape: f32[48,32], index: 16, kind: output, shape index: {1}]
  %17 = xla_tuple %s15, %s16
  %s18 = sld [smem:[#allocation0]]
  $region109: #{tpu_custom_call.1} parent=0
    _
  %s20 = ssub.s32 1, %s18
  %s21 = scalar_select 0, %s20, %s18
  $region1: #{tpu_custom_call.1} parent=0
    #allocation5 [shape = 'u8[8192]{0}', space=vmem, size = 0x2000, scoped, tag = 'output window, operand 0, single buffered']
    #allocation6 [shape = 's32[2]{0}', space=sflag, size = 0x8, scoped, tag = 'scoped memory for tpu_custom_call.1']
    %22 = vsyncpa [#allocation6], 0
    loop: start=0, step=1, limit=5
    $region2: #{tpu_custom_call.1} parent=1 // loop_pre_header
      _
    $region3: #{tpu_custom_call.1} parent=1 // loop_header
      %s24 = sphi 0, %s28
      %p25 = scmp.ge.s32.totalorder %s24, 5
      %s32 = sphi 0, %s32
      %s34 = sphi 0, %s32
      %s35 = sphi 0, %s34
      %s49 = sphi 0, %s35
      %s53 = sphi 0, %s53
      %s55 = sphi 0, %s53
      %s56 = sphi 0, %s55
      %s70 = sphi 0, %s56
      %s76 = sphi 0, %s78
      %s79 = sphi 0, %s76
      %s80 = sphi 0, %s79
      %s96 = sphi 0, %s80
      %s102 = sphi 0, %s104
      %s105 = sphi 0, %s102
      %s106 = sphi 0, %s105
      %s122 = sphi 0, %s106
      %s128 = sphi 0, %s130
      %s131 = sphi 0, %s128
      %s132 = sphi 0, %s131
      %s148 = sphi 0, %s132
      %s152 = sphi 0, %s152
      %s154 = sphi 0, %s152
      %s155 = sphi 0, %s154
      %s169 = sphi 0, %s155
      %s173 = sphi 0, %s173
      %s175 = sphi 0, %s173
      %s176 = sphi 0, %s175
      %s190 = sphi 0, %s176
      %s194 = sphi 0, %s194
      %s196 = sphi 0, %s194
      %s197 = sphi 0, %s196
      %s211 = sphi 0, %s197
      %s215 = sphi 0, %s215
      %s217 = sphi 0, %s215
      %s218 = sphi 0, %s217
      %s232 = sphi 0, %s218
      %s236 = sphi 0, %s236
      %s238 = sphi 0, %s236
      %s239 = sphi 0, %s238
      %s253 = sphi 0, %s239
      %s257 = sphi 0, %s257
      %s259 = sphi 0, %s257
      %s260 = sphi 0, %s259
      %s274 = sphi 0, %s260
      %s278 = sphi 0, %s278
      %s280 = sphi 0, %s278
      %s281 = sphi 0, %s280
      %s295 = sphi 0, %s281
      %s299 = sphi 0, %s299
      %s301 = sphi 0, %s299
      %s302 = sphi 0, %s301
      %s316 = sphi 0, %s302
      %s320 = sphi 0, %s320
      %s322 = sphi 0, %s320
      %s323 = sphi 0, %s322
      %s337 = sphi 0, %s323
      %s341 = sphi 0, %s341
      %s343 = sphi 0, %s341
      %s344 = sphi 0, %s343
      %s358 = sphi 0, %s344
      %s362 = sphi 0, %s362
      %s364 = sphi 0, %s362
      %s365 = sphi 0, %s364
      %s379 = sphi 0, %s365
      %s385 = sphi 0, %s387
      %s388 = sphi 0, %s385
      %s389 = sphi 0, %s388
      %s405 = sphi 0, %s389
    $region4: #{tpu_custom_call.1} parent=1 // loop_header_branch
      %27 = sbr.rel (%p25) target = $region8
    $region5: #{tpu_custom_call.1} parent=1 // loop_body
      %s29 = ssub.s32 %s24, 1
      %s30 = ssub.s32 %s24, 2
      %s31 = sadd.s32 %s24, 1
      %s33 = sadd.s32 %s32, 1
      %p36 = scmp.eq.s32.totalorder %s24, 2
      %p37 = scmp.ne.s32.totalorder %s32, %s34
      %p38 = scmp.eq.s32.totalorder %s24, 0
      %p39 = por %p37, %p38
      %p40 = scmp.ne.s32.totalorder %s32, %s34
      %p41 = scmp.eq.s32.totalorder %s29, 2
      %p42 = por %p40, %p41
      %p43 = scmp.ne.s32.totalorder %s34, %s35
      %p44 = scmp.eq.s32.totalorder %s29, 0
      %p45 = por %p43, %p44
      %p46 = scmp.ne.s32.totalorder %s34, %s35
      %p47 = scmp.eq.s32.totalorder %s30, 2
      %p48 = por %p46, %p47
      %p50 = scmp.ne.s32.totalorder %s35, %s49
      %p51 = scmp.eq.s32.totalorder %s30, 0
      %p52 = por %p50, %p51
      %s54 = sadd.s32 %s53, 1
      %p57 = scmp.eq.s32.totalorder %s24, 2
      %p58 = scmp.ne.s32.totalorder %s53, %s55
      %p59 = scmp.eq.s32.totalorder %s24, 0
      %p60 = por %p58, %p59
      %p61 = scmp.ne.s32.totalorder %s53, %s55
      %p62 = scmp.eq.s32.totalorder %s29, 2
      %p63 = por %p61, %p62
      %p64 = scmp.ne.s32.totalorder %s55, %s56
      %p65 = scmp.eq.s32.totalorder %s29, 0
      %p66 = por %p64, %p65
      %p67 = scmp.ne.s32.totalorder %s55, %s56
      %p68 = scmp.eq.s32.totalorder %s30, 2
      %p69 = por %p67, %p68
      %p71 = scmp.ne.s32.totalorder %s56, %s70
      %p72 = scmp.eq.s32.totalorder %s30, 0
      %p73 = por %p71, %p72
      %s74 = ssub.s32 %s24, %s31
      %p75 = scmp.eq.s32.totalorder %s74, 0
      %s77 = sadd.s32 %s76, 1
      %s78 = scalar_select %p75, %s76, %s77
      %p81 = pneg %p75
      %p82 = scmp.eq.s32.totalorder %s24, 2
      %p83 = por %p81, %p82
      %p84 = scmp.ne.s32.totalorder %s76, %s79
      %p85 = scmp.eq.s32.totalorder %s24, 0
      %p86 = por %p84, %p85
      %p87 = scmp.ne.s32.totalorder %s76, %s79
      %p88 = scmp.eq.s32.totalorder %s29, 2
      %p89 = por %p87, %p88
      %p90 = scmp.ne.s32.totalorder %s79, %s80
      %p91 = scmp.eq.s32.totalorder %s29, 0
      %p92 = por %p90, %p91
      %p93 = scmp.ne.s32.totalorder %s79, %s80
      %p94 = scmp.eq.s32.totalorder %s30, 2
      %p95 = por %p93, %p94
      %p97 = scmp.ne.s32.totalorder %s80, %s96
      %p98 = scmp.eq.s32.totalorder %s30, 0
      %p99 = por %p97, %p98
      %s100 = ssub.s32 %s24, %s31
      %p101 = scmp.eq.s32.totalorder %s100, 0
      %s103 = sadd.s32 %s102, 1
      %s104 = scalar_select %p101, %s102, %s103
      %p107 = pneg %p101
      %p108 = scmp.eq.s32.totalorder %s24, 2
      %p109 = por %p107, %p108
      %p110 = scmp.ne.s32.totalorder %s102, %s105
      %p111 = scmp.eq.s32.totalorder %s24, 0
      %p112 = por %p110, %p111
      %p113 = scmp.ne.s32.totalorder %s102, %s105
      %p114 = scmp.eq.s32.totalorder %s29, 2
      %p115 = por %p113, %p114
      %p116 = scmp.ne.s32.totalorder %s105, %s106
      %p117 = scmp.eq.s32.totalorder %s29, 0
      %p118 = por %p116, %p117
      %p119 = scmp.ne.s32.totalorder %s105, %s106
      %p120 = scmp.eq.s32.totalorder %s30, 2
      %p121 = por %p119, %p120
      %p123 = scmp.ne.s32.totalorder %s106, %s122
      %p124 = scmp.eq.s32.totalorder %s30, 0
      %p125 = por %p123, %p124
      %s126 = ssub.s32 %s24, %s31
      %p127 = scmp.eq.s32.totalorder %s126, 0
      %s129 = sadd.s32 %s128, 1
      %s130 = scalar_select %p127, %s128, %s129
      %p133 = pneg %p127
      %p134 = scmp.eq.s32.totalorder %s24, 2
      %p135 = por %p133, %p134
      %p136 = scmp.ne.s32.totalorder %s128, %s131
      %p137 = scmp.eq.s32.totalorder %s24, 0
      %p138 = por %p136, %p137
      %p139 = scmp.ne.s32.totalorder %s128, %s131
      %p140 = scmp.eq.s32.totalorder %s29, 2
      %p141 = por %p139, %p140
      %p142 = scmp.ne.s32.totalorder %s131, %s132
      %p143 = scmp.eq.s32.totalorder %s29, 0
      %p144 = por %p142, %p143
      %p145 = scmp.ne.s32.totalorder %s131, %s132
      %p146 = scmp.eq.s32.totalorder %s30, 2
      %p147 = por %p145, %p146
      %p149 = scmp.ne.s32.totalorder %s132, %s148
      %p150 = scmp.eq.s32.totalorder %s30, 0
      %p151 = por %p149, %p150
      %s153 = sadd.s32 %s152, 1
      %p156 = scmp.eq.s32.totalorder %s24, 2
      %p157 = scmp.ne.s32.totalorder %s152, %s154
      %p158 = scmp.eq.s32.totalorder %s24, 0
      %p159 = por %p157, %p158
      %p160 = scmp.ne.s32.totalorder %s152, %s154
      %p161 = scmp.eq.s32.totalorder %s29, 2
      %p162 = por %p160, %p161
      %p163 = scmp.ne.s32.totalorder %s154, %s155
      %p164 = scmp.eq.s32.totalorder %s29, 0
      %p165 = por %p163, %p164
      %p166 = scmp.ne.s32.totalorder %s154, %s155
      %p167 = scmp.eq.s32.totalorder %s30, 2
      %p168 = por %p166, %p167
      %p170 = scmp.ne.s32.totalorder %s155, %s169
      %p171 = scmp.eq.s32.totalorder %s30, 0
      %p172 = por %p170, %p171
      %s174 = sadd.s32 %s173, 1
      %p177 = scmp.eq.s32.totalorder %s24, 2
      %p178 = scmp.ne.s32.totalorder %s173, %s175
      %p179 = scmp.eq.s32.totalorder %s24, 0
      %p180 = por %p178, %p179
      %p181 = scmp.ne.s32.totalorder %s173, %s175
      %p182 = scmp.eq.s32.totalorder %s29, 2
      %p183 = por %p181, %p182
      %p184 = scmp.ne.s32.totalorder %s175, %s176
      %p185 = scmp.eq.s32.totalorder %s29, 0
      %p186 = por %p184, %p185
      %p187 = scmp.ne.s32.totalorder %s175, %s176
      %p188 = scmp.eq.s32.totalorder %s30, 2
      %p189 = por %p187, %p188
      %p191 = scmp.ne.s32.totalorder %s176, %s190
      %p192 = scmp.eq.s32.totalorder %s30, 0
      %p193 = por %p191, %p192
      %s195 = sadd.s32 %s194, 1
      %p198 = scmp.eq.s32.totalorder %s24, 2
      %p199 = scmp.ne.s32.totalorder %s194, %s196
      %p200 = scmp.eq.s32.totalorder %s24, 0
      %p201 = por %p199, %p200
      %p202 = scmp.ne.s32.totalorder %s194, %s196
      %p203 = scmp.eq.s32.totalorder %s29, 2
      %p204 = por %p202, %p203
      %p205 = scmp.ne.s32.totalorder %s196, %s197
      %p206 = scmp.eq.s32.totalorder %s29, 0
      %p207 = por %p205, %p206
      %p208 = scmp.ne.s32.totalorder %s196, %s197
      %p209 = scmp.eq.s32.totalorder %s30, 2
      %p210 = por %p208, %p209
      %p212 = scmp.ne.s32.totalorder %s197, %s211
      %p213 = scmp.eq.s32.totalorder %s30, 0
      %p214 = por %p212, %p213
      %s216 = sadd.s32 %s215, 1
      %p219 = scmp.eq.s32.totalorder %s24, 2
      %p220 = scmp.ne.s32.totalorder %s215, %s217
      %p221 = scmp.eq.s32.totalorder %s24, 0
      %p222 = por %p220, %p221
      %p223 = scmp.ne.s32.totalorder %s215, %s217
      %p224 = scmp.eq.s32.totalorder %s29, 2
      %p225 = por %p223, %p224
      %p226 = scmp.ne.s32.totalorder %s217, %s218
      %p227 = scmp.eq.s32.totalorder %s29, 0
      %p228 = por %p226, %p227
      %p229 = scmp.ne.s32.totalorder %s217, %s218
      %p230 = scmp.eq.s32.totalorder %s30, 2
      %p231 = por %p229, %p230
      %p233 = scmp.ne.s32.totalorder %s218, %s232
      %p234 = scmp.eq.s32.totalorder %s30, 0
      %p235 = por %p233, %p234
      %s237 = sadd.s32 %s236, 1
      %p240 = scmp.eq.s32.totalorder %s24, 2
      %p241 = scmp.ne.s32.totalorder %s236, %s238
      %p242 = scmp.eq.s32.totalorder %s24, 0
      %p243 = por %p241, %p242
      %p244 = scmp.ne.s32.totalorder %s236, %s238
      %p245 = scmp.eq.s32.totalorder %s29, 2
      %p246 = por %p244, %p245
      %p247 = scmp.ne.s32.totalorder %s238, %s239
      %p248 = scmp.eq.s32.totalorder %s29, 0
      %p249 = por %p247, %p248
      %p250 = scmp.ne.s32.totalorder %s238, %s239
      %p251 = scmp.eq.s32.totalorder %s30, 2
      %p252 = por %p250, %p251
      %p254 = scmp.ne.s32.totalorder %s239, %s253
      %p255 = scmp.eq.s32.totalorder %s30, 0
      %p256 = por %p254, %p255
      %s258 = sadd.s32 %s257, 1
      %p261 = scmp.eq.s32.totalorder %s24, 2
      %p262 = scmp.ne.s32.totalorder %s257, %s259
      %p263 = scmp.eq.s32.totalorder %s24, 0
      %p264 = por %p262, %p263
      %p265 = scmp.ne.s32.totalorder %s257, %s259
      %p266 = scmp.eq.s32.totalorder %s29, 2
      %p267 = por %p265, %p266
      %p268 = scmp.ne.s32.totalorder %s259, %s260
      %p269 = scmp.eq.s32.totalorder %s29, 0
      %p270 = por %p268, %p269
      %p271 = scmp.ne.s32.totalorder %s259, %s260
      %p272 = scmp.eq.s32.totalorder %s30, 2
      %p273 = por %p271, %p272
      %p275 = scmp.ne.s32.totalorder %s260, %s274
      %p276 = scmp.eq.s32.totalorder %s30, 0
      %p277 = por %p275, %p276
      %s279 = sadd.s32 %s278, 1
      %p282 = scmp.eq.s32.totalorder %s24, 2
      %p283 = scmp.ne.s32.totalorder %s278, %s280
      %p284 = scmp.eq.s32.totalorder %s24, 0
      %p285 = por %p283, %p284
      %p286 = scmp.ne.s32.totalorder %s278, %s280
      %p287 = scmp.eq.s32.totalorder %s29, 2
      %p288 = por %p286, %p287
      %p289 = scmp.ne.s32.totalorder %s280, %s281
      %p290 = scmp.eq.s32.totalorder %s29, 0
      %p291 = por %p289, %p290
      %p292 = scmp.ne.s32.totalorder %s280, %s281
      %p293 = scmp.eq.s32.totalorder %s30, 2
      %p294 = por %p292, %p293
      %p296 = scmp.ne.s32.totalorder %s281, %s295
      %p297 = scmp.eq.s32.totalorder %s30, 0
      %p298 = por %p296, %p297
      %s300 = sadd.s32 %s299, 1
      %p303 = scmp.eq.s32.totalorder %s24, 2
      %p304 = scmp.ne.s32.totalorder %s299, %s301
      %p305 = scmp.eq.s32.totalorder %s24, 0
      %p306 = por %p304, %p305
      %p307 = scmp.ne.s32.totalorder %s299, %s301
      %p308 = scmp.eq.s32.totalorder %s29, 2
      %p309 = por %p307, %p308
      %p310 = scmp.ne.s32.totalorder %s301, %s302
      %p311 = scmp.eq.s32.totalorder %s29, 0
      %p312 = por %p310, %p311
      %p313 = scmp.ne.s32.totalorder %s301, %s302
      %p314 = scmp.eq.s32.totalorder %s30, 2
      %p315 = por %p313, %p314
      %p317 = scmp.ne.s32.totalorder %s302, %s316
      %p318 = scmp.eq.s32.totalorder %s30, 0
      %p319 = por %p317, %p318
      %s321 = sadd.s32 %s320, 1
      %p324 = scmp.eq.s32.totalorder %s24, 2
      %p325 = scmp.ne.s32.totalorder %s320, %s322
      %p326 = scmp.eq.s32.totalorder %s24, 0
      %p327 = por %p325, %p326
      %p328 = scmp.ne.s32.totalorder %s320, %s322
      %p329 = scmp.eq.s32.totalorder %s29, 2
      %p330 = por %p328, %p329
      %p331 = scmp.ne.s32.totalorder %s322, %s323
      %p332 = scmp.eq.s32.totalorder %s29, 0
      %p333 = por %p331, %p332
      %p334 = scmp.ne.s32.totalorder %s322, %s323
      %p335 = scmp.eq.s32.totalorder %s30, 2
      %p336 = por %p334, %p335
      %p338 = scmp.ne.s32.totalorder %s323, %s337
      %p339 = scmp.eq.s32.totalorder %s30, 0
      %p340 = por %p338, %p339
      %s342 = sadd.s32 %s341, 1
      %p345 = scmp.eq.s32.totalorder %s24, 2
      %p346 = scmp.ne.s32.totalorder %s341, %s343
      %p347 = scmp.eq.s32.totalorder %s24, 0
      %p348 = por %p346, %p347
      %p349 = scmp.ne.s32.totalorder %s341, %s343
      %p350 = scmp.eq.s32.totalorder %s29, 2
      %p351 = por %p349, %p350
      %p352 = scmp.ne.s32.totalorder %s343, %s344
      %p353 = scmp.eq.s32.totalorder %s29, 0
      %p354 = por %p352, %p353
      %p355 = scmp.ne.s32.totalorder %s343, %s344
      %p356 = scmp.eq.s32.totalorder %s30, 2
      %p357 = por %p355, %p356
      %p359 = scmp.ne.s32.totalorder %s344, %s358
      %p360 = scmp.eq.s32.totalorder %s30, 0
      %p361 = por %p359, %p360
      %s363 = sadd.s32 %s362, 1
      %p366 = scmp.eq.s32.totalorder %s24, 2
      %p367 = scmp.ne.s32.totalorder %s362, %s364
      %p368 = scmp.eq.s32.totalorder %s24, 0
      %p369 = por %p367, %p368
      %p370 = scmp.ne.s32.totalorder %s362, %s364
      %p371 = scmp.eq.s32.totalorder %s29, 2
      %p372 = por %p370, %p371
      %p373 = scmp.ne.s32.totalorder %s364, %s365
      %p374 = scmp.eq.s32.totalorder %s29, 0
      %p375 = por %p373, %p374
      %p376 = scmp.ne.s32.totalorder %s364, %s365
      %p377 = scmp.eq.s32.totalorder %s30, 2
      %p378 = por %p376, %p377
      %p380 = scmp.ne.s32.totalorder %s365, %s379
      %p381 = scmp.eq.s32.totalorder %s30, 0
      %p382 = por %p380, %p381
      %s383 = ssub.s32 %s24, %s31
      %p384 = scmp.eq.s32.totalorder %s383, 0
      %s386 = sadd.s32 %s385, 1
      %s387 = scalar_select %p384, %s385, %s386
      %p390 = pneg %p384
      %p391 = scmp.eq.s32.totalorder %s24, 2
      %p392 = por %p390, %p391
      %p393 = scmp.ne.s32.totalorder %s385, %s388
      %p394 = scmp.eq.s32.totalorder %s24, 0
      %p395 = por %p393, %p394
      %p396 = scmp.ne.s32.totalorder %s385, %s388
      %p397 = scmp.eq.s32.totalorder %s29, 2
      %p398 = por %p396, %p397
      %p399 = scmp.ne.s32.totalorder %s388, %s389
      %p400 = scmp.eq.s32.totalorder %s29, 0
      %p401 = por %p399, %p400
      %p402 = scmp.ne.s32.totalorder %s388, %s389
      %p403 = scmp.eq.s32.totalorder %s30, 2
      %p404 = por %p402, %p403
      %p406 = scmp.ne.s32.totalorder %s389, %s405
      %p407 = scmp.eq.s32.totalorder %s30, 0
      %p408 = por %p406, %p407
      %p409 = scmp.le.s32.totalorder 1, %s24
      %p410 = scmp.lt.s32.totalorder %s24, 4
      %p411 = pnand %p409, %p410
      %p412 = pneg %p411
      // Predicated region
      $region9: #{tpu_custom_call.1} parent=5 // pred_check
        _
      $region10: #{tpu_custom_call.1} parent=5 // pred_check_branch
        %414 = sbr.rel (%p411) target = $region12
      $region11: #{tpu_custom_call.1} parent=5 // pred_region
        %s415 = ssub.s32 %s24, 1
        // Predicated region
        $region13: #{tpu_custom_call.1} parent=11 // pred_check
          %p416 = pneg %p45
        $region14: #{tpu_custom_call.1} parent=11 // pred_check_branch
          %418 = sbr.rel (%p416) target = $region16
        $region15: #{tpu_custom_call.1} parent=11 // pred_region
          _
        $region16: #{tpu_custom_call.1} parent=11 // pred_fallthru
          _
        // Predicated region
        $region17: #{tpu_custom_call.1} parent=11 // pred_check
          %p419 = pneg %p66
        $region18: #{tpu_custom_call.1} parent=11 // pred_check_branch
          %421 = sbr.rel (%p419) target = $region20
        $region19: #{tpu_custom_call.1} parent=11 // pred_region
          _
        $region20: #{tpu_custom_call.1} parent=11 // pred_fallthru
          _
        // Predicated region
        $region21: #{tpu_custom_call.1} parent=11 // pred_check
          %p422 = pneg %p165
        $region22: #{tpu_custom_call.1} parent=11 // pred_check_branch
          %424 = sbr.rel (%p422) target = $region24
        $region23: #{tpu_custom_call.1} parent=11 // pred_region
          _
        $region24: #{tpu_custom_call.1} parent=11 // pred_fallthru
          _
        // Predicated region
        $region25: #{tpu_custom_call.1} parent=11 // pred_check
          %p425 = pneg %p186
        $region26: #{tpu_custom_call.1} parent=11 // pred_check_branch
          %427 = sbr.rel (%p425) target = $region28
        $region27: #{tpu_custom_call.1} parent=11 // pred_region
          _
        $region28: #{tpu_custom_call.1} parent=11 // pred_fallthru
          _
        // Predicated region
        $region29: #{tpu_custom_call.1} parent=11 // pred_check
          %p428 = pneg %p207
        $region30: #{tpu_custom_call.1} parent=11 // pred_check_branch
          %430 = sbr.rel (%p428) target = $region32
        $region31: #{tpu_custom_call.1} parent=11 // pred_region
          _
        $region32: #{tpu_custom_call.1} parent=11 // pred_fallthru
          _
        // Predicated region
        $region33: #{tpu_custom_call.1} parent=11 // pred_check
          %p431 = pneg %p228
        $region34: #{tpu_custom_call.1} parent=11 // pred_check_branch
          %433 = sbr.rel (%p431) target = $region36
        $region35: #{tpu_custom_call.1} parent=11 // pred_region
          _
        $region36: #{tpu_custom_call.1} parent=11 // pred_fallthru
          _
        // Predicated region
        $region37: #{tpu_custom_call.1} parent=11 // pred_check
          %p434 = pneg %p249
        $region38: #{tpu_custom_call.1} parent=11 // pred_check_branch
          %436 = sbr.rel (%p434) target = $region40
        $region39: #{tpu_custom_call.1} parent=11 // pred_region
          _
        $region40: #{tpu_custom_call.1} parent=11 // pred_fallthru
          _
        // Predicated region
        $region41: #{tpu_custom_call.1} parent=11 // pred_check
          %p437 = pneg %p270
        $region42: #{tpu_custom_call.1} parent=11 // pred_check_branch
          %439 = sbr.rel (%p437) target = $region44
        $region43: #{tpu_custom_call.1} parent=11 // pred_region
          _
        $region44: #{tpu_custom_call.1} parent=11 // pred_fallthru
          _
        // Predicated region
        $region45: #{tpu_custom_call.1} parent=11 // pred_check
          %p440 = pneg %p291
        $region46: #{tpu_custom_call.1} parent=11 // pred_check_branch
          %442 = sbr.rel (%p440) target = $region48
        $region47: #{tpu_custom_call.1} parent=11 // pred_region
          _
        $region48: #{tpu_custom_call.1} parent=11 // pred_fallthru
          _
        // Predicated region
        $region49: #{tpu_custom_call.1} parent=11 // pred_check
          %p443 = pneg %p312
        $region50: #{tpu_custom_call.1} parent=11 // pred_check_branch
          %445 = sbr.rel (%p443) target = $region52
        $region51: #{tpu_custom_call.1} parent=11 // pred_region
          _
        $region52: #{tpu_custom_call.1} parent=11 // pred_fallthru
          _
        // Predicated region
        $region53: #{tpu_custom_call.1} parent=11 // pred_check
          %p446 = pneg %p333
        $region54: #{tpu_custom_call.1} parent=11 // pred_check_branch
          %448 = sbr.rel (%p446) target = $region56
        $region55: #{tpu_custom_call.1} parent=11 // pred_region
          _
        $region56: #{tpu_custom_call.1} parent=11 // pred_fallthru
          _
        // Predicated region
        $region57: #{tpu_custom_call.1} parent=11 // pred_check
          %p449 = pneg %p354
        $region58: #{tpu_custom_call.1} parent=11 // pred_check_branch
          %451 = sbr.rel (%p449) target = $region60
        $region59: #{tpu_custom_call.1} parent=11 // pred_region
          _
        $region60: #{tpu_custom_call.1} parent=11 // pred_fallthru
          _
      $region12: #{tpu_custom_call.1} parent=5 // pred_fallthru
        _
      %p452 = scmp.lt.s32.totalorder %s24, 3
      // Predicated region
      $region61: #{tpu_custom_call.1} parent=5 // pred_check
        %p453 = pneg %p452
      $region62: #{tpu_custom_call.1} parent=5 // pred_check_branch
        %455 = sbr.rel (%p453) target = $region64
      $region63: #{tpu_custom_call.1} parent=5 // pred_region
        // Predicated region
        $region65: #{tpu_custom_call.1} parent=63 // pred_check
          %p456 = pneg %p86
        $region66: #{tpu_custom_call.1} parent=63 // pred_check_branch
          %458 = sbr.rel (%p456) target = $region68
        $region67: #{tpu_custom_call.1} parent=63 // pred_region
          %s459 = smul.u32 2, %s24
          %p460 = scmp.lt.s32.totalorder %s459, 5
          %s461 = scalar_select %p460, %s459, 5
          %s462 = smul.addr %s461, 8
          %s463 = scalar_lea.vmem %s2, %s462
          %s464 = smul.u32 2, %s24
        $region68: #{tpu_custom_call.1} parent=63 // pred_fallthru
          _
        // Predicated region
        $region69: #{tpu_custom_call.1} parent=63 // pred_check
          %p465 = pneg %p112
        $region70: #{tpu_custom_call.1} parent=63 // pred_check_branch
          %467 = sbr.rel (%p465) target = $region72
        $region71: #{tpu_custom_call.1} parent=63 // pred_region
          %s468 = smul.u32 2, %s24
          %p469 = scmp.lt.s32.totalorder %s468, 5
          %s470 = scalar_select %p469, %s468, 5
          %s471 = smul.addr %s470, 8
          %s472 = scalar_lea.vmem %s3, %s471
          %s473 = smul.u32 2, %s24
        $region72: #{tpu_custom_call.1} parent=63 // pred_fallthru
          _
        // Predicated region
        $region73: #{tpu_custom_call.1} parent=63 // pred_check
          %p474 = pneg %p138
        $region74: #{tpu_custom_call.1} parent=63 // pred_check_branch
          %476 = sbr.rel (%p474) target = $region76
        $region75: #{tpu_custom_call.1} parent=63 // pred_region
          %s477 = smul.u32 2, %s24
          %p478 = scmp.lt.s32.totalorder %s477, 5
          %s479 = scalar_select %p478, %s477, 5
          %s480 = smul.addr %s479, 8
          %s481 = scalar_lea.vmem %s4, %s480
          %s482 = smul.u32 2, %s24
        $region76: #{tpu_custom_call.1} parent=63 // pred_fallthru
          _
      $region64: #{tpu_custom_call.1} parent=5 // pred_fallthru
        _
      %p483 = scmp.le.s32.totalorder 1, %s24
      %p484 = scmp.lt.s32.totalorder %s24, 4
      %p485 = pnand %p483, %p484
      %p486 = pneg %p485
      // Predicated region
      $region77: #{tpu_custom_call.1} parent=5 // pred_check
        _
      $region78: #{tpu_custom_call.1} parent=5 // pred_check_branch
        %488 = sbr.rel (%p485) target = $region80
      $region79: #{tpu_custom_call.1} parent=5 // pred_region
        %s489 = ssub.s32 %s24, 1
        %p490 = pneg %p45
        %p491 = pneg %p42
        %p492 = pneg %p66
        %p493 = pneg %p63
        %s494 = smul.u32 2, %s29
        %p495 = scmp.lt.s32.totalorder %s494, 5
        %s496 = scalar_select %p495, %s494, 5
        %s497 = smul.addr %s496, 8
        %s498 = scalar_lea.vmem %s2, %s497
        %p499 = pneg %p92
        %p500 = pneg %p89
        %s501 = smul.u32 2, %s29
        %p502 = scmp.lt.s32.totalorder %s501, 5
        %s503 = scalar_select %p502, %s501, 5
        %s504 = smul.addr %s503, 8
        %s505 = scalar_lea.vmem %s3, %s504
        %p506 = pneg %p118
        %p507 = pneg %p115
        %s508 = smul.u32 2, %s29
        %p509 = scmp.lt.s32.totalorder %s508, 5
        %s510 = scalar_select %p509, %s508, 5
        %s511 = smul.addr %s510, 8
        %s512 = scalar_lea.vmem %s4, %s511
        %p513 = pneg %p144
        %p514 = pneg %p141
        %p515 = pneg %p165
        %p516 = pneg %p162
        %p517 = pneg %p186
        %p518 = pneg %p183
        %p519 = pneg %p207
        %p520 = pneg %p204
        %p521 = pneg %p228
        %p522 = pneg %p225
        %p523 = pneg %p249
        %p524 = pneg %p246
        %p525 = pneg %p270
        %p526 = pneg %p267
        %p527 = pneg %p291
        %p528 = pneg %p288
        %p529 = pneg %p312
        %p530 = pneg %p309
        %p531 = pneg %p333
        %p532 = pneg %p330
        %p533 = pneg %p354
        %p534 = pneg %p351
        %p535 = pneg %p375
        %p536 = pneg %p372
        %p537 = pneg %p401
        %p538 = pneg %p398
        %s539 = smul.u32 2, %s29
        %p540 = scmp.lt.s32.totalorder %s539, 5
        %s541 = scalar_select %p540, %s539, 5
        %s542 = smul.addr %s541, 8
        %s543 = scalar_lea.vmem %s16, %s542
        %s544 = smul.u32 2, %s29
        %p545 = scmp.lt.s32.totalorder %s544, 5
        %s546 = scalar_select %p545, %s544, 5
        %s547 = smul.addr %s546, 8
        %s548 = scalar_lea.vmem %s2, %s547
        %s549 = smul.u32 2, %s29
        %s550 = smul.u32 2, %s29
        %p551 = scmp.lt.s32.totalorder %s550, 5
        %s552 = scalar_select %p551, %s550, 5
        %s553 = smul.addr %s552, 8
        %s554 = scalar_lea.vmem %s3, %s553
        %s555 = smul.u32 2, %s29
        %s556 = smul.u32 2, %s29
        %p557 = scmp.lt.s32.totalorder %s556, 5
        %s558 = scalar_select %p557, %s556, 5
        %s559 = smul.addr %s558, 8
        %s560 = scalar_lea.vmem %s4, %s559
        %s561 = smul.u32 2, %s29
        %s562 = smul.u32 2, %s29
        %p563 = scmp.lt.s32.totalorder %s562, 5
        %s564 = scalar_select %p563, %s562, 5
        %s565 = smul.addr %s564, 8
        %s566 = scalar_lea.vmem %s16, %s565
        %s567 = smul.u32 2, %s29
        %p569 = scmp.eq.s32.totalorder %s29, 0
        // Predicated region
        $region81: #{tpu_custom_call.1} parent=79 // pred_check
          %p570 = pneg %p569
        $region82: #{tpu_custom_call.1} parent=79 // pred_check_branch
          %572 = sbr.rel (%p570) target = $region84
        $region83: #{tpu_custom_call.1} parent=79 // pred_region
          %v573 = vld [vmem:[%s0] sm:$0xff]
          %v574 = vld [vmem:[%s0 + $0x8] sm:$0xff]
          %v575 = vld [vmem:[%s1] sm:$0xff]
          %v576 = vld [vmem:[%s1 + $0x8] sm:$0xff]
          %v577 = vld [vmem:[%s10] sm:$0x3]
          %vm578 = vcmask 15360
          %v580 = vsel %vm578, %v575, 0
          %v583 = vsel %vm578, %v576, 0
          %vm585 = vcmask 1041408
          %v587 = vsel %vm585, %v577, 0
          %589 = vmatprep.subr.mxu0 0.0
          %590 = vmatpush1.msra.mxu0 0.0
          %591 = vmatprep.subr.mxu0 0.0
          %592 = vmatpush1.msra.mxu0 0.0
          %593 = vmatprep.subr.mxu0 0.0
          %594 = vmatpush1.msra.mxu0 0.0
          %595 = vmatprep.subr.mxu0 0.0
          %596 = vmatpush1.msra.mxu0 0.0
          %597 = vmatprep.subr.mxu0 0.0
          %598 = vmatpush1.msra.mxu0 0.0
          %599 = vmatprep.subr.mxu0 0.0
          %600 = vmatpush1.msra.mxu0 0.0
          %601 = vmatprep.subr.mxu0 0.0
          %602 = vmatpush1.msra.mxu0 0.0
          %603 = vmatprep.subr.mxu0 0.0
          %604 = vmatpush1.msra.mxu0 0.0
          %605 = vmatprep.subr.mxu0 0.0
          %606 = vmatpush1.msra.mxu0 0.0
          %607 = vmatprep.subr.mxu0 0.0
          %608 = vmatpush1.msra.mxu0 0.0
          %609 = vmatprep.subr.mxu0 0.0
          %610 = vmatpush1.msra.mxu0 0.0
          %611 = vmatprep.subr.mxu0 0.0
          %612 = vmatpush1.msra.mxu0 0.0
          %613 = vmatprep.subr.mxu0 0.0
          %614 = vmatpush1.msra.mxu0 0.0
          %615 = vmatprep.subr.mxu0 0.0
          %616 = vmatpush1.msra.mxu0 0.0
          %617 = vmatprep.subr.mxu0 0.0
          %618 = vmatpush1.msra.mxu0 0.0
          %619 = vmatprep.subr.mxu0 0.0
          %620 = vmatpush1.msra.mxu0 %v587
          %621 = vmatprep.subr.mxu0 0.0
          %622 = vmatpush2.msra.mxu0 0.0
          %623 = vmatprep.subr.mxu0 0.0
          %624 = vmatpush2.msra.mxu0 0.0
          %625 = vmatprep.subr.mxu0 0.0
          %626 = vmatpush2.msra.mxu0 0.0
          %627 = vmatprep.subr.mxu0 0.0
          %628 = vmatpush2.msra.mxu0 0.0
          %629 = vmatprep.subr.mxu0 0.0
          %630 = vmatpush2.msra.mxu0 0.0
          %631 = vmatprep.subr.mxu0 0.0
          %632 = vmatpush2.msra.mxu0 0.0
          %633 = vmatprep.subr.mxu0 0.0
          %634 = vmatpush2.msra.mxu0 0.0
          %635 = vmatprep.subr.mxu0 0.0
          %636 = vmatpush2.msra.mxu0 0.0
          %637 = vmatprep.subr.mxu0 0.0
          %638 = vmatpush2.msra.mxu0 0.0
          %639 = vmatprep.subr.mxu0 0.0
          %640 = vmatpush2.msra.mxu0 0.0
          %641 = vmatprep.subr.mxu0 0.0
          %642 = vmatpush2.msra.mxu0 0.0
          %643 = vmatprep.subr.mxu0 0.0
          %644 = vmatpush2.msra.mxu0 0.0
          %645 = vmatprep.subr.mxu0 0.0
          %646 = vmatpush2.msra.mxu0 0.0
          %647 = vmatprep.subr.mxu0 0.0
          %648 = vmatpush2.msra.mxu0 0.0
          %649 = vmatprep.subr.mxu0 0.0
          %650 = vmatpush2.msra.mxu0 0.0
          %651 = vmatprep.subr.mxu0 0.0
          %652 = vmatpush2.msra.mxu0 0.0
          %653 = vmatprep.mubr.f32.mxu0 0.0
          %654 = vmatmul.mubr.f32.gmra.mxu0 %v580
          %v655 = vpop.f32.mrf.mxu0
          %v656 = vadd.f32 0.0, %v655
          %v657 = vpop.f32.mrf.mxu0
          %658 = vmatprep.mubr.f32.mxu0 0.0
          %659 = vmatmul.mubr.f32.gmra.mxu0 %v583
          %v660 = vpop.f32.mrf.mxu0
          %v661 = vadd.f32 0.0, %v660
          %v662 = vpop.f32.mrf.mxu0
          %663 = vdwg.mxu0
          %v664 = vand.u32 2147483647, %v656
          %vm665 = vcmp.le.f32.partialorder %v664, 0.7853982
          %vm666 = vcmp.lt.s32.totalorder %v656, 0
          %v667 = vand.u32 %v656, 2139095040
          %v668 = vshrl.u32 %v667, 23
          %v669 = vsub.s32 %v668, 127
          %v670 = vand.u32 2147483647, %v656
          %v671 = vand.u32 %v670, 8388607
          %v672 = vor.u32 %v671, 8388608
          %v673 = vsub.s32 0, %v672
          %v674 = vadd.s32 %v669, 1
          %vm675 = vcmp.gt.s32.totalorder %v674, 0
          %v676 = vsel %vm675, %v674, 0
          %v677 = vshrl.u32 %v676, 5
          %v678 = vand.u32 %v676, 31
          %v679 = vsub.s32 32, %v678
          %v680 = vshrl.u32 683565275, %v679
          %v681 = vshll.u32 683565275, %v678
          %v682 = vshrl.u32 2475754826, %v679
          %v683 = vor.u32 %v681, %v682
          %v684 = vshll.u32 2475754826, %v678
          %v685 = vshrl.u32 2131351028, %v679
          %v686 = vor.u32 %v684, %v685
          %v687 = vshll.u32 2131351028, %v678
          %v688 = vshrl.u32 2102212464, %v679
          %v689 = vor.u32 %v687, %v688
          %v690 = vshll.u32 2102212464, %v678
          %v691 = vshrl.u32 920167782, %v679
          %v692 = vor.u32 %v690, %v691
          %v693 = vshll.u32 920167782, %v678
          %v694 = vshrl.u32 1326507024, %v679
          %v695 = vor.u32 %v693, %v694
          %vm696 = vcmp.lt.s32.totalorder %v677, 1
          %vm697 = vcmp.lt.s32.totalorder %v677, 2
          %vm698 = vcmp.lt.s32.totalorder %v677, 3
          %vm699 = vcmp.lt.s32.totalorder %v677, 4
          %v700 = vsel %vm696, %v680, %v683
          %v701 = vsel %vm699, %v689, 2102212464
          %v702 = vsel %vm698, %v686, %v701
          %v703 = vsel %vm697, %v700, %v702
          %v704 = vsel %vm696, %v683, %v686
          %v705 = vsel %vm699, %v692, 920167782
          %v706 = vsel %vm698, %v689, %v705
          %v707 = vsel %vm697, %v704, %v706
          %v708 = vsel %vm696, %v686, %v689
          %v709 = vsel %vm699, %v695, 1326507024
          %v710 = vsel %vm698, %v692, %v709
          %v711 = vsel %vm697, %v708, %v710
          %v712 = vshll.u32 %v672, 8
          %v713 = vmul.u32.u64.compose %v712, %v711
          %v714 = vextract.low.u32 %v713
          %v715 = vextract.high.u32 %v713
          %v716 = vmul.u32.u64.compose %v712, %v707
          %v717 = vextract.low.u32 %v716
          %v718 = vextract.high.u32 %v716
          %v719 = vmul.u32 %v712, %v703
          %v720 = vadd.s32 %v715, %v717
          %vm721 = vc.u32 %v715, %v717
          %v722 = vadd.s32 %v718, 1
          %v723 = vsel %vm721, %v722, %v718
          %v724 = vadd.s32 %v719, %v723
          %v725 = vadd.s32 %v724, 536870912
          %v726 = vshrl.u32 %v725, 30
          %v727 = vshll.u32 %v726, 30
          %v728 = vsub.s32 %v724, %v727
          %vm729 = vcmp.lt.s32.totalorder %v728, 0
          %v730 = vsub.s32 0, %v728
          %v731 = vsel %vm729, %v730, %v728
          %v732 = vclz %v731
          %v733 = vsub.s32 %v732, 2
          %vm734 = vcmp.gt.s32.totalorder 0, %v733
          %v735 = vsel %vm734, 0, %v733
          %v736 = vsub.s32 32, %v735
          %v737 = vshll.u32 %v728, %v735
          %v738 = vshrl.u32 %v720, %v736
          %v739 = vor.u32 %v737, %v738
          %v740 = vsub.s32 4294967266, %v735
          %v741 = vadd.s32 %v740, 127
          %v742 = vshll.u32 %v741, 23
          %v743 = vor.u32 4788187, %v742
          %v744 = vand.u32 2147483647, %v743
          %v746 = vcvt.s32.f32 %v739
          %v747 = vmul.f32 %v746, %v744
          %v748 = vxor.u32 %v747, 2147483648
          %v749 = vsel %vm666, %v748, %v747
          %v750 = vsub.s32 4, %v726
          %v751 = vsel %vm666, %v750, %v726
          %v752 = vsel %vm665, %v656, %v749
          %v753 = vsel %vm665, 0, %v751
          %v754 = vcosq.f32.pop %v752
          %v755 = vsinq.f32.pop %v752
          %vm756 = vweird.f32 %v656
          %v757 = vand.u32 %v753, 3
          %vm758 = vcmp.lt.s32.totalorder %v757, 2
          %vm759 = vcmp.eq.s32.totalorder %v757, 0
          %v760 = vxor.u32 %v755, 2147483648
          %v761 = vsel %vm759, %v754, %v760
          %vm762 = vcmp.eq.s32.totalorder %v757, 2
          %v763 = vxor.u32 %v754, 2147483648
          %v764 = vsel %vm762, %v763, %v755
          %v765 = vsel %vm758, %v761, %v764
          %v766 = vsel %vm756, nan, %v765
          %v767 = vand.u32 2147483647, %v661
          %vm768 = vcmp.le.f32.partialorder %v767, 0.7853982
          %vm769 = vcmp.lt.s32.totalorder %v661, 0
          %v770 = vand.u32 %v661, 2139095040
          %v771 = vshrl.u32 %v770, 23
          %v772 = vsub.s32 %v771, 127
          %v773 = vand.u32 2147483647, %v661
          %v774 = vand.u32 %v773, 8388607
          %v775 = vor.u32 %v774, 8388608
          %v776 = vsub.s32 0, %v775
          %v777 = vadd.s32 %v772, 1
          %vm778 = vcmp.gt.s32.totalorder %v777, 0
          %v779 = vsel %vm778, %v777, 0
          %v780 = vshrl.u32 %v779, 5
          %v781 = vand.u32 %v779, 31
          %v782 = vsub.s32 32, %v781
          %v783 = vshrl.u32 683565275, %v782
          %v784 = vshll.u32 683565275, %v781
          %v785 = vshrl.u32 2475754826, %v782
          %v786 = vor.u32 %v784, %v785
          %v787 = vshll.u32 2475754826, %v781
          %v788 = vshrl.u32 2131351028, %v782
          %v789 = vor.u32 %v787, %v788
          %v790 = vshll.u32 2131351028, %v781
          %v791 = vshrl.u32 2102212464, %v782
          %v792 = vor.u32 %v790, %v791
          %v793 = vshll.u32 2102212464, %v781
          %v794 = vshrl.u32 920167782, %v782
          %v795 = vor.u32 %v793, %v794
          %v796 = vshll.u32 920167782, %v781
          %v797 = vshrl.u32 1326507024, %v782
          %v798 = vor.u32 %v796, %v797
          %vm799 = vcmp.lt.s32.totalorder %v780, 1
          %vm800 = vcmp.lt.s32.totalorder %v780, 2
          %vm801 = vcmp.lt.s32.totalorder %v780, 3
          %vm802 = vcmp.lt.s32.totalorder %v780, 4
          %v803 = vsel %vm799, %v783, %v786
          %v804 = vsel %vm802, %v792, 2102212464
          %v805 = vsel %vm801, %v789, %v804
          %v806 = vsel %vm800, %v803, %v805
          %v807 = vsel %vm799, %v786, %v789
          %v808 = vsel %vm802, %v795, 920167782
          %v809 = vsel %vm801, %v792, %v808
          %v810 = vsel %vm800, %v807, %v809
          %v811 = vsel %vm799, %v789, %v792
          %v812 = vsel %vm802, %v798, 1326507024
          %v813 = vsel %vm801, %v795, %v812
          %v814 = vsel %vm800, %v811, %v813
          %v815 = vshll.u32 %v775, 8
          %v816 = vmul.u32.u64.compose %v815, %v814
          %v817 = vextract.low.u32 %v816
          %v818 = vextract.high.u32 %v816
          %v819 = vmul.u32.u64.compose %v815, %v810
          %v820 = vextract.low.u32 %v819
          %v821 = vextract.high.u32 %v819
          %v822 = vmul.u32 %v815, %v806
          %v823 = vadd.s32 %v818, %v820
          %vm824 = vc.u32 %v818, %v820
          %v825 = vadd.s32 %v821, 1
          %v826 = vsel %vm824, %v825, %v821
          %v827 = vadd.s32 %v822, %v826
          %v828 = vadd.s32 %v827, 536870912
          %v829 = vshrl.u32 %v828, 30
          %v830 = vshll.u32 %v829, 30
          %v831 = vsub.s32 %v827, %v830
          %vm832 = vcmp.lt.s32.totalorder %v831, 0
          %v833 = vsub.s32 0, %v831
          %v834 = vsel %vm832, %v833, %v831
          %v835 = vclz %v834
          %v836 = vsub.s32 %v835, 2
          %vm837 = vcmp.gt.s32.totalorder 0, %v836
          %v838 = vsel %vm837, 0, %v836
          %v839 = vsub.s32 32, %v838
          %v840 = vshll.u32 %v831, %v838
          %v841 = vshrl.u32 %v823, %v839
          %v842 = vor.u32 %v840, %v841
          %v843 = vsub.s32 4294967266, %v838
          %v844 = vadd.s32 %v843, 127
          %v845 = vshll.u32 %v844, 23
          %v846 = vor.u32 4788187, %v845
          %v847 = vand.u32 2147483647, %v846
          %v849 = vcvt.s32.f32 %v842
          %v850 = vmul.f32 %v849, %v847
          %v851 = vxor.u32 %v850, 2147483648
          %v852 = vsel %vm769, %v851, %v850
          %v853 = vsub.s32 4, %v829
          %v854 = vsel %vm769, %v853, %v829
          %v855 = vsel %vm768, %v661, %v852
          %v856 = vsel %vm768, 0, %v854
          %v857 = vcosq.f32.pop %v855
          %v858 = vsinq.f32.pop %v855
          %vm859 = vweird.f32 %v661
          %v860 = vand.u32 %v856, 3
          %vm861 = vcmp.lt.s32.totalorder %v860, 2
          %vm862 = vcmp.eq.s32.totalorder %v860, 0
          %v863 = vxor.u32 %v858, 2147483648
          %v864 = vsel %vm862, %v857, %v863
          %vm865 = vcmp.eq.s32.totalorder %v860, 2
          %v866 = vxor.u32 %v857, 2147483648
          %v867 = vsel %vm865, %v866, %v858
          %v868 = vsel %vm861, %v864, %v867
          %v869 = vsel %vm859, nan, %v868
          %v870 = vand.u32 2147483647, %v656
          %vm871 = vcmp.le.f32.partialorder %v870, 0.7853982
          %vm872 = vcmp.lt.s32.totalorder %v656, 0
          %v873 = vand.u32 %v656, 2139095040
          %v874 = vshrl.u32 %v873, 23
          %v875 = vsub.s32 %v874, 127
          %v876 = vand.u32 2147483647, %v656
          %v877 = vand.u32 %v876, 8388607
          %v878 = vor.u32 %v877, 8388608
          %v879 = vsub.s32 0, %v878
          %v880 = vadd.s32 %v875, 1
          %vm881 = vcmp.gt.s32.totalorder %v880, 0
          %v882 = vsel %vm881, %v880, 0
          %v883 = vshrl.u32 %v882, 5
          %v884 = vand.u32 %v882, 31
          %v885 = vsub.s32 32, %v884
          %v886 = vshrl.u32 683565275, %v885
          %v887 = vshll.u32 683565275, %v884
          %v888 = vshrl.u32 2475754826, %v885
          %v889 = vor.u32 %v887, %v888
          %v890 = vshll.u32 2475754826, %v884
          %v891 = vshrl.u32 2131351028, %v885
          %v892 = vor.u32 %v890, %v891
          %v893 = vshll.u32 2131351028, %v884
          %v894 = vshrl.u32 2102212464, %v885
          %v895 = vor.u32 %v893, %v894
          %v896 = vshll.u32 2102212464, %v884
          %v897 = vshrl.u32 920167782, %v885
          %v898 = vor.u32 %v896, %v897
          %v899 = vshll.u32 920167782, %v884
          %v900 = vshrl.u32 1326507024, %v885
          %v901 = vor.u32 %v899, %v900
          %vm902 = vcmp.lt.s32.totalorder %v883, 1
          %vm903 = vcmp.lt.s32.totalorder %v883, 2
          %vm904 = vcmp.lt.s32.totalorder %v883, 3
          %vm905 = vcmp.lt.s32.totalorder %v883, 4
          %v906 = vsel %vm902, %v886, %v889
          %v907 = vsel %vm905, %v895, 2102212464
          %v908 = vsel %vm904, %v892, %v907
          %v909 = vsel %vm903, %v906, %v908
          %v910 = vsel %vm902, %v889, %v892
          %v911 = vsel %vm905, %v898, 920167782
          %v912 = vsel %vm904, %v895, %v911
          %v913 = vsel %vm903, %v910, %v912
          %v914 = vsel %vm902, %v892, %v895
          %v915 = vsel %vm905, %v901, 1326507024
          %v916 = vsel %vm904, %v898, %v915
          %v917 = vsel %vm903, %v914, %v916
          %v918 = vshll.u32 %v878, 8
          %v919 = vmul.u32.u64.compose %v918, %v917
          %v920 = vextract.low.u32 %v919
          %v921 = vextract.high.u32 %v919
          %v922 = vmul.u32.u64.compose %v918, %v913
          %v923 = vextract.low.u32 %v922
          %v924 = vextract.high.u32 %v922
          %v925 = vmul.u32 %v918, %v909
          %v926 = vadd.s32 %v921, %v923
          %vm927 = vc.u32 %v921, %v923
          %v928 = vadd.s32 %v924, 1
          %v929 = vsel %vm927, %v928, %v924
          %v930 = vadd.s32 %v925, %v929
          %v931 = vadd.s32 %v930, 536870912
          %v932 = vshrl.u32 %v931, 30
          %v933 = vshll.u32 %v932, 30
          %v934 = vsub.s32 %v930, %v933
          %vm935 = vcmp.lt.s32.totalorder %v934, 0
          %v936 = vsub.s32 0, %v934
          %v937 = vsel %vm935, %v936, %v934
          %v938 = vclz %v937
          %v939 = vsub.s32 %v938, 2
          %vm940 = vcmp.gt.s32.totalorder 0, %v939
          %v941 = vsel %vm940, 0, %v939
          %v942 = vsub.s32 32, %v941
          %v943 = vshll.u32 %v934, %v941
          %v944 = vshrl.u32 %v926, %v942
          %v945 = vor.u32 %v943, %v944
          %v946 = vsub.s32 4294967266, %v941
          %v947 = vadd.s32 %v946, 127
          %v948 = vshll.u32 %v947, 23
          %v949 = vor.u32 4788187, %v948
          %v950 = vand.u32 2147483647, %v949
          %v952 = vcvt.s32.f32 %v945
          %v953 = vmul.f32 %v952, %v950
          %v954 = vxor.u32 %v953, 2147483648
          %v955 = vsel %vm872, %v954, %v953
          %v956 = vsub.s32 4, %v932
          %v957 = vsel %vm872, %v956, %v932
          %v958 = vsel %vm871, %v656, %v955
          %v959 = vsel %vm871, 0, %v957
          %v960 = vcosq.f32.pop %v958
          %v961 = vsinq.f32.pop %v958
          %vm962 = vweird.f32 %v656
          %v963 = vadd.s32 %v959, 3
          %v964 = vand.u32 %v963, 3
          %vm965 = vcmp.lt.s32.totalorder %v964, 2
          %vm966 = vcmp.eq.s32.totalorder %v964, 0
          %v967 = vxor.u32 %v961, 2147483648
          %v968 = vsel %vm966, %v960, %v967
          %vm969 = vcmp.eq.s32.totalorder %v964, 2
          %v970 = vxor.u32 %v960, 2147483648
          %v971 = vsel %vm969, %v970, %v961
          %v972 = vsel %vm965, %v968, %v971
          %v973 = vsel %vm962, nan, %v972
          %v974 = vand.u32 2147483647, %v661
          %vm975 = vcmp.le.f32.partialorder %v974, 0.7853982
          %vm976 = vcmp.lt.s32.totalorder %v661, 0
          %v977 = vand.u32 %v661, 2139095040
          %v978 = vshrl.u32 %v977, 23
          %v979 = vsub.s32 %v978, 127
          %v980 = vand.u32 2147483647, %v661
          %v981 = vand.u32 %v980, 8388607
          %v982 = vor.u32 %v981, 8388608
          %v983 = vsub.s32 0, %v982
          %v984 = vadd.s32 %v979, 1
          %vm985 = vcmp.gt.s32.totalorder %v984, 0
          %v986 = vsel %vm985, %v984, 0
          %v987 = vshrl.u32 %v986, 5
          %v988 = vand.u32 %v986, 31
          %v989 = vsub.s32 32, %v988
          %v990 = vshrl.u32 683565275, %v989
          %v991 = vshll.u32 683565275, %v988
          %v992 = vshrl.u32 2475754826, %v989
          %v993 = vor.u32 %v991, %v992
          %v994 = vshll.u32 2475754826, %v988
          %v995 = vshrl.u32 2131351028, %v989
          %v996 = vor.u32 %v994, %v995
          %v997 = vshll.u32 2131351028, %v988
          %v998 = vshrl.u32 2102212464, %v989
          %v999 = vor.u32 %v997, %v998
          %v1000 = vshll.u32 2102212464, %v988
          %v1001 = vshrl.u32 920167782, %v989
          %v1002 = vor.u32 %v1000, %v1001
          %v1003 = vshll.u32 920167782, %v988
          %v1004 = vshrl.u32 1326507024, %v989
          %v1005 = vor.u32 %v1003, %v1004
          %vm1006 = vcmp.lt.s32.totalorder %v987, 1
          %vm1007 = vcmp.lt.s32.totalorder %v987, 2
          %vm1008 = vcmp.lt.s32.totalorder %v987, 3
          %vm1009 = vcmp.lt.s32.totalorder %v987, 4
          %v1010 = vsel %vm1006, %v990, %v993
          %v1011 = vsel %vm1009, %v999, 2102212464
          %v1012 = vsel %vm1008, %v996, %v1011
          %v1013 = vsel %vm1007, %v1010, %v1012
          %v1014 = vsel %vm1006, %v993, %v996
          %v1015 = vsel %vm1009, %v1002, 920167782
          %v1016 = vsel %vm1008, %v999, %v1015
          %v1017 = vsel %vm1007, %v1014, %v1016
          %v1018 = vsel %vm1006, %v996, %v999
          %v1019 = vsel %vm1009, %v1005, 1326507024
          %v1020 = vsel %vm1008, %v1002, %v1019
          %v1021 = vsel %vm1007, %v1018, %v1020
          %v1022 = vshll.u32 %v982, 8
          %v1023 = vmul.u32.u64.compose %v1022, %v1021
          %v1024 = vextract.low.u32 %v1023
          %v1025 = vextract.high.u32 %v1023
          %v1026 = vmul.u32.u64.compose %v1022, %v1017
          %v1027 = vextract.low.u32 %v1026
          %v1028 = vextract.high.u32 %v1026
          %v1029 = vmul.u32 %v1022, %v1013
          %v1030 = vadd.s32 %v1025, %v1027
          %vm1031 = vc.u32 %v1025, %v1027
          %v1032 = vadd.s32 %v1028, 1
          %v1033 = vsel %vm1031, %v1032, %v1028
          %v1034 = vadd.s32 %v1029, %v1033
          %v1035 = vadd.s32 %v1034, 536870912
          %v1036 = vshrl.u32 %v1035, 30
          %v1037 = vshll.u32 %v1036, 30
          %v1038 = vsub.s32 %v1034, %v1037
          %vm1039 = vcmp.lt.s32.totalorder %v1038, 0
          %v1040 = vsub.s32 0, %v1038
          %v1041 = vsel %vm1039, %v1040, %v1038
          %v1042 = vclz %v1041
          %v1043 = vsub.s32 %v1042, 2
          %vm1044 = vcmp.gt.s32.totalorder 0, %v1043
          %v1045 = vsel %vm1044, 0, %v1043
          %v1046 = vsub.s32 32, %v1045
          %v1047 = vshll.u32 %v1038, %v1045
          %v1048 = vshrl.u32 %v1030, %v1046
          %v1049 = vor.u32 %v1047, %v1048
          %v1050 = vsub.s32 4294967266, %v1045
          %v1051 = vadd.s32 %v1050, 127
          %v1052 = vshll.u32 %v1051, 23
          %v1053 = vor.u32 4788187, %v1052
          %v1054 = vand.u32 2147483647, %v1053
          %v1056 = vcvt.s32.f32 %v1049
          %v1057 = vmul.f32 %v1056, %v1054
          %v1058 = vxor.u32 %v1057, 2147483648
          %v1059 = vsel %vm976, %v1058, %v1057
          %v1060 = vsub.s32 4, %v1036
          %v1061 = vsel %vm976, %v1060, %v1036
          %v1062 = vsel %vm975, %v661, %v1059
          %v1063 = vsel %vm975, 0, %v1061
          %v1064 = vcosq.f32.pop %v1062
          %v1065 = vsinq.f32.pop %v1062
          %vm1066 = vweird.f32 %v661
          %v1067 = vadd.s32 %v1063, 3
          %v1068 = vand.u32 %v1067, 3
          %vm1069 = vcmp.lt.s32.totalorder %v1068, 2
          %vm1070 = vcmp.eq.s32.totalorder %v1068, 0
          %v1071 = vxor.u32 %v1065, 2147483648
          %v1072 = vsel %vm1070, %v1064, %v1071
          %vm1073 = vcmp.eq.s32.totalorder %v1068, 2
          %v1074 = vxor.u32 %v1064, 2147483648
          %v1075 = vsel %vm1073, %v1074, %v1065
          %v1076 = vsel %vm1069, %v1072, %v1075
          %v1077 = vsel %vm1066, nan, %v1076
          %v1078 = vld [vmem:[%s5] sm:$0xff]
          %v1079 = vld [vmem:[%s5 + $0x8] sm:$0xff]
          %v1080 = vld [vmem:[%s5 + $0x10] sm:$0xff]
          %v1081 = vld [vmem:[%s5 + $0x18] sm:$0xff]
          %v1082 = vld [vmem:[%s5 + $0x20] sm:$0x1]
          %vm1083 = vcmask 269312
          %v1085 = vsel %vm1083, %v573, 0
          %v1088 = vsel %vm1083, %v574, 0
          %vm1090 = vcmask 1040384
          %v1092 = vsel %vm1090, %v1082, 0
          %1094 = vmatprep.subr.mxu0 0.0
          %1095 = vmatpush1.msra.mxu0 0.0
          %1096 = vmatprep.subr.mxu0 0.0
          %1097 = vmatpush1.msra.mxu0 0.0
          %1098 = vmatprep.subr.mxu0 0.0
          %1099 = vmatpush1.msra.mxu0 0.0
          %1100 = vmatprep.subr.mxu0 0.0
          %1101 = vmatpush1.msra.mxu0 0.0
          %1102 = vmatprep.subr.mxu0 0.0
          %1103 = vmatpush1.msra.mxu0 0.0
          %1104 = vmatprep.subr.mxu0 0.0
          %1105 = vmatpush1.msra.mxu0 0.0
          %1106 = vmatprep.subr.mxu0 0.0
          %1107 = vmatpush1.msra.mxu0 0.0
          %1108 = vmatprep.subr.mxu0 0.0
          %1109 = vmatpush1.msra.mxu0 0.0
          %1110 = vmatprep.subr.mxu0 0.0
          %1111 = vmatpush1.msra.mxu0 0.0
          %1112 = vmatprep.subr.mxu0 0.0
          %1113 = vmatpush1.msra.mxu0 0.0
          %1114 = vmatprep.subr.mxu0 0.0
          %1115 = vmatpush1.msra.mxu0 0.0
          %1116 = vmatprep.subr.mxu0 0.0
          %1117 = vmatpush1.msra.mxu0 %v1092
          %1118 = vmatprep.subr.mxu0 0.0
          %1119 = vmatpush1.msra.mxu0 %v1081
          %1120 = vmatprep.subr.mxu0 0.0
          %1121 = vmatpush1.msra.mxu0 %v1080
          %1122 = vmatprep.subr.mxu0 0.0
          %1123 = vmatpush1.msra.mxu0 %v1079
          %1124 = vmatprep.subr.mxu0 0.0
          %1125 = vmatpush1.msra.mxu0 %v1078
          %1126 = vmatprep.subr.mxu0 0.0
          %1127 = vmatpush2.msra.mxu0 0.0
          %1128 = vmatprep.subr.mxu0 0.0
          %1129 = vmatpush2.msra.mxu0 0.0
          %1130 = vmatprep.subr.mxu0 0.0
          %1131 = vmatpush2.msra.mxu0 0.0
          %1132 = vmatprep.subr.mxu0 0.0
          %1133 = vmatpush2.msra.mxu0 0.0
          %1134 = vmatprep.subr.mxu0 0.0
          %1135 = vmatpush2.msra.mxu0 0.0
          %1136 = vmatprep.subr.mxu0 0.0
          %1137 = vmatpush2.msra.mxu0 0.0
          %1138 = vmatprep.subr.mxu0 0.0
          %1139 = vmatpush2.msra.mxu0 0.0
          %1140 = vmatprep.subr.mxu0 0.0
          %1141 = vmatpush2.msra.mxu0 0.0
          %1142 = vmatprep.subr.mxu0 0.0
          %1143 = vmatpush2.msra.mxu0 0.0
          %1144 = vmatprep.subr.mxu0 0.0
          %1145 = vmatpush2.msra.mxu0 0.0
          %1146 = vmatprep.subr.mxu0 0.0
          %1147 = vmatpush2.msra.mxu0 0.0
          %1148 = vmatprep.subr.mxu0 0.0
          %1149 = vmatpush2.msra.mxu0 0.0
          %1150 = vmatprep.subr.mxu0 0.0
          %1151 = vmatpush2.msra.mxu0 0.0
          %1152 = vmatprep.subr.mxu0 0.0
          %1153 = vmatpush2.msra.mxu0 0.0
          %1154 = vmatprep.subr.mxu0 0.0
          %1155 = vmatpush2.msra.mxu0 0.0
          %1156 = vmatprep.subr.mxu0 0.0
          %1157 = vmatpush2.msra.mxu0 0.0
          %1158 = vmatprep.mubr.f32.mxu0 0.0
          %1159 = vmatmul.mubr.f32.gmra.mxu0 %v1085
          %v1160 = vpop.f32.mrf.mxu0
          %v1161 = vadd.f32 0.0, %v1160
          %v1162 = vpop.f32.mrf.mxu0
          %1163 = vmatprep.mubr.f32.mxu0 0.0
          %1164 = vmatmul.mubr.f32.gmra.mxu0 %v1088
          %v1165 = vpop.f32.mrf.mxu0
          %v1166 = vadd.f32 0.0, %v1165
          %v1167 = vpop.f32.mrf.mxu0
          %1168 = vdwg.mxu0
          %v1169 = vmul.f32 %v1161, %v766
          %v1170 = vmul.f32 %v1166, %v869
          %v1171 = vld [vmem:[%s6] sm:$0xff]
          %v1172 = vld [vmem:[%s6 + $0x8] sm:$0xff]
          %v1173 = vld [vmem:[%s6 + $0x10] sm:$0xff]
          %v1174 = vld [vmem:[%s6 + $0x18] sm:$0xff]
          %v1175 = vld [vmem:[%s6 + $0x20] sm:$0x1]
          %v1177 = vsel %vm1090, %v1175, 0
          %1179 = vmatprep.subr.mxu0 0.0
          %1180 = vmatpush1.msra.mxu0 0.0
          %1181 = vmatprep.subr.mxu0 0.0
          %1182 = vmatpush1.msra.mxu0 0.0
          %1183 = vmatprep.subr.mxu0 0.0
          %1184 = vmatpush1.msra.mxu0 0.0
          %1185 = vmatprep.subr.mxu0 0.0
          %1186 = vmatpush1.msra.mxu0 0.0
          %1187 = vmatprep.subr.mxu0 0.0
          %1188 = vmatpush1.msra.mxu0 0.0
          %1189 = vmatprep.subr.mxu0 0.0
          %1190 = vmatpush1.msra.mxu0 0.0
          %1191 = vmatprep.subr.mxu0 0.0
          %1192 = vmatpush1.msra.mxu0 0.0
          %1193 = vmatprep.subr.mxu0 0.0
          %1194 = vmatpush1.msra.mxu0 0.0
          %1195 = vmatprep.subr.mxu0 0.0
          %1196 = vmatpush1.msra.mxu0 0.0
          %1197 = vmatprep.subr.mxu0 0.0
          %1198 = vmatpush1.msra.mxu0 0.0
          %1199 = vmatprep.subr.mxu0 0.0
          %1200 = vmatpush1.msra.mxu0 0.0
          %1201 = vmatprep.subr.mxu0 0.0
          %1202 = vmatpush1.msra.mxu0 %v1177
          %1203 = vmatprep.subr.mxu0 0.0
          %1204 = vmatpush1.msra.mxu0 %v1174
          %1205 = vmatprep.subr.mxu0 0.0
          %1206 = vmatpush1.msra.mxu0 %v1173
          %1207 = vmatprep.subr.mxu0 0.0
          %1208 = vmatpush1.msra.mxu0 %v1172
          %1209 = vmatprep.subr.mxu0 0.0
          %1210 = vmatpush1.msra.mxu0 %v1171
          %1211 = vmatprep.subr.mxu0 0.0
          %1212 = vmatpush2.msra.mxu0 0.0
          %1213 = vmatprep.subr.mxu0 0.0
          %1214 = vmatpush2.msra.mxu0 0.0
          %1215 = vmatprep.subr.mxu0 0.0
          %1216 = vmatpush2.msra.mxu0 0.0
          %1217 = vmatprep.subr.mxu0 0.0
          %1218 = vmatpush2.msra.mxu0 0.0
          %1219 = vmatprep.subr.mxu0 0.0
          %1220 = vmatpush2.msra.mxu0 0.0
          %1221 = vmatprep.subr.mxu0 0.0
          %1222 = vmatpush2.msra.mxu0 0.0
          %1223 = vmatprep.subr.mxu0 0.0
          %1224 = vmatpush2.msra.mxu0 0.0
          %1225 = vmatprep.subr.mxu0 0.0
          %1226 = vmatpush2.msra.mxu0 0.0
          %1227 = vmatprep.subr.mxu0 0.0
          %1228 = vmatpush2.msra.mxu0 0.0
          %1229 = vmatprep.subr.mxu0 0.0
          %1230 = vmatpush2.msra.mxu0 0.0
          %1231 = vmatprep.subr.mxu0 0.0
          %1232 = vmatpush2.msra.mxu0 0.0
          %1233 = vmatprep.subr.mxu0 0.0
          %1234 = vmatpush2.msra.mxu0 0.0
          %1235 = vmatprep.subr.mxu0 0.0
          %1236 = vmatpush2.msra.mxu0 0.0
          %1237 = vmatprep.subr.mxu0 0.0
          %1238 = vmatpush2.msra.mxu0 0.0
          %1239 = vmatprep.subr.mxu0 0.0
          %1240 = vmatpush2.msra.mxu0 0.0
          %1241 = vmatprep.subr.mxu0 0.0
          %1242 = vmatpush2.msra.mxu0 0.0
          %1243 = vmatprep.mubr.f32.mxu0 0.0
          %1244 = vmatmul.mubr.f32.gmra.mxu0 %v1085
          %v1245 = vpop.f32.mrf.mxu0
          %v1246 = vadd.f32 0.0, %v1245
          %v1247 = vpop.f32.mrf.mxu0
          %1248 = vmatprep.mubr.f32.mxu0 0.0
          %1249 = vmatmul.mubr.f32.gmra.mxu0 %v1088
          %v1250 = vpop.f32.mrf.mxu0
          %v1251 = vadd.f32 0.0, %v1250
          %v1252 = vpop.f32.mrf.mxu0
          %1253 = vdwg.mxu0
          %v1254 = vmul.f32 %v1246, %v973
          %v1255 = vmul.f32 %v1251, %v1077
          %v1256 = vadd.f32 %v1169, %v1254
          %v1257 = vadd.f32 %v1170, %v1255
          %v1258 = vld [vmem:[%s7] sm:$0xff]
          %v1259 = vld [vmem:[%s7 + $0x8] sm:$0xff]
          %v1260 = vld [vmem:[%s7 + $0x10] sm:$0xff]
          %v1261 = vld [vmem:[%s7 + $0x18] sm:$0xff]
          %v1262 = vld [vmem:[%s7 + $0x20] sm:$0x1]
          %v1264 = vsel %vm1090, %v1262, 0
          %1266 = vmatprep.subr.mxu0 0.0
          %1267 = vmatpush1.msra.mxu0 0.0
          %1268 = vmatprep.subr.mxu0 0.0
          %1269 = vmatpush1.msra.mxu0 0.0
          %1270 = vmatprep.subr.mxu0 0.0
          %1271 = vmatpush1.msra.mxu0 0.0
          %1272 = vmatprep.subr.mxu0 0.0
          %1273 = vmatpush1.msra.mxu0 0.0
          %1274 = vmatprep.subr.mxu0 0.0
          %1275 = vmatpush1.msra.mxu0 0.0
          %1276 = vmatprep.subr.mxu0 0.0
          %1277 = vmatpush1.msra.mxu0 0.0
          %1278 = vmatprep.subr.mxu0 0.0
          %1279 = vmatpush1.msra.mxu0 0.0
          %1280 = vmatprep.subr.mxu0 0.0
          %1281 = vmatpush1.msra.mxu0 0.0
          %1282 = vmatprep.subr.mxu0 0.0
          %1283 = vmatpush1.msra.mxu0 0.0
          %1284 = vmatprep.subr.mxu0 0.0
          %1285 = vmatpush1.msra.mxu0 0.0
          %1286 = vmatprep.subr.mxu0 0.0
          %1287 = vmatpush1.msra.mxu0 0.0
          %1288 = vmatprep.subr.mxu0 0.0
          %1289 = vmatpush1.msra.mxu0 %v1264
          %1290 = vmatprep.subr.mxu0 0.0
          %1291 = vmatpush1.msra.mxu0 %v1261
          %1292 = vmatprep.subr.mxu0 0.0
          %1293 = vmatpush1.msra.mxu0 %v1260
          %1294 = vmatprep.subr.mxu0 0.0
          %1295 = vmatpush1.msra.mxu0 %v1259
          %1296 = vmatprep.subr.mxu0 0.0
          %1297 = vmatpush1.msra.mxu0 %v1258
          %1298 = vmatprep.subr.mxu0 0.0
          %1299 = vmatpush2.msra.mxu0 0.0
          %1300 = vmatprep.subr.mxu0 0.0
          %1301 = vmatpush2.msra.mxu0 0.0
          %1302 = vmatprep.subr.mxu0 0.0
          %1303 = vmatpush2.msra.mxu0 0.0
          %1304 = vmatprep.subr.mxu0 0.0
          %1305 = vmatpush2.msra.mxu0 0.0
          %1306 = vmatprep.subr.mxu0 0.0
          %1307 = vmatpush2.msra.mxu0 0.0
          %1308 = vmatprep.subr.mxu0 0.0
          %1309 = vmatpush2.msra.mxu0 0.0
          %1310 = vmatprep.subr.mxu0 0.0
          %1311 = vmatpush2.msra.mxu0 0.0
          %1312 = vmatprep.subr.mxu0 0.0
          %1313 = vmatpush2.msra.mxu0 0.0
          %1314 = vmatprep.subr.mxu0 0.0
          %1315 = vmatpush2.msra.mxu0 0.0
          %1316 = vmatprep.subr.mxu0 0.0
          %1317 = vmatpush2.msra.mxu0 0.0
          %1318 = vmatprep.subr.mxu0 0.0
          %1319 = vmatpush2.msra.mxu0 0.0
          %1320 = vmatprep.subr.mxu0 0.0
          %1321 = vmatpush2.msra.mxu0 0.0
          %1322 = vmatprep.subr.mxu0 0.0
          %1323 = vmatpush2.msra.mxu0 0.0
          %1324 = vmatprep.subr.mxu0 0.0
          %1325 = vmatpush2.msra.mxu0 0.0
          %1326 = vmatprep.subr.mxu0 0.0
          %1327 = vmatpush2.msra.mxu0 0.0
          %1328 = vmatprep.subr.mxu0 0.0
          %1329 = vmatpush2.msra.mxu0 0.0
          %1330 = vmatprep.mubr.f32.mxu0 0.0
          %1331 = vmatmul.mubr.f32.gmra.mxu0 %v1085
          %v1332 = vpop.f32.mrf.mxu0
          %v1333 = vadd.f32 0.0, %v1332
          %v1334 = vpop.f32.mrf.mxu0
          %1335 = vmatprep.mubr.f32.mxu0 0.0
          %1336 = vmatmul.mubr.f32.gmra.mxu0 %v1088
          %v1337 = vpop.f32.mrf.mxu0
          %v1338 = vadd.f32 0.0, %v1337
          %v1339 = vpop.f32.mrf.mxu0
          %1340 = vdwg.mxu0
          %v1341 = vmul.f32 %v1333, %v766
          %v1342 = vmul.f32 %v1338, %v869
          %v1343 = vld [vmem:[%s8] sm:$0xff]
          %v1344 = vld [vmem:[%s8 + $0x8] sm:$0xff]
          %v1345 = vld [vmem:[%s8 + $0x10] sm:$0xff]
          %v1346 = vld [vmem:[%s8 + $0x18] sm:$0xff]
          %v1347 = vld [vmem:[%s8 + $0x20] sm:$0x1]
          %v1349 = vsel %vm1090, %v1347, 0
          %1351 = vmatprep.subr.mxu0 0.0
          %1352 = vmatpush1.msra.mxu0 0.0
          %1353 = vmatprep.subr.mxu0 0.0
          %1354 = vmatpush1.msra.mxu0 0.0
          %1355 = vmatprep.subr.mxu0 0.0
          %1356 = vmatpush1.msra.mxu0 0.0
          %1357 = vmatprep.subr.mxu0 0.0
          %1358 = vmatpush1.msra.mxu0 0.0
          %1359 = vmatprep.subr.mxu0 0.0
          %1360 = vmatpush1.msra.mxu0 0.0
          %1361 = vmatprep.subr.mxu0 0.0
          %1362 = vmatpush1.msra.mxu0 0.0
          %1363 = vmatprep.subr.mxu0 0.0
          %1364 = vmatpush1.msra.mxu0 0.0
          %1365 = vmatprep.subr.mxu0 0.0
          %1366 = vmatpush1.msra.mxu0 0.0
          %1367 = vmatprep.subr.mxu0 0.0
          %1368 = vmatpush1.msra.mxu0 0.0
          %1369 = vmatprep.subr.mxu0 0.0
          %1370 = vmatpush1.msra.mxu0 0.0
          %1371 = vmatprep.subr.mxu0 0.0
          %1372 = vmatpush1.msra.mxu0 0.0
          %1373 = vmatprep.subr.mxu0 0.0
          %1374 = vmatpush1.msra.mxu0 %v1349
          %1375 = vmatprep.subr.mxu0 0.0
          %1376 = vmatpush1.msra.mxu0 %v1346
          %1377 = vmatprep.subr.mxu0 0.0
          %1378 = vmatpush1.msra.mxu0 %v1345
          %1379 = vmatprep.subr.mxu0 0.0
          %1380 = vmatpush1.msra.mxu0 %v1344
          %1381 = vmatprep.subr.mxu0 0.0
          %1382 = vmatpush1.msra.mxu0 %v1343
          %1383 = vmatprep.subr.mxu0 0.0
          %1384 = vmatpush2.msra.mxu0 0.0
          %1385 = vmatprep.subr.mxu0 0.0
          %1386 = vmatpush2.msra.mxu0 0.0
          %1387 = vmatprep.subr.mxu0 0.0
          %1388 = vmatpush2.msra.mxu0 0.0
          %1389 = vmatprep.subr.mxu0 0.0
          %1390 = vmatpush2.msra.mxu0 0.0
          %1391 = vmatprep.subr.mxu0 0.0
          %1392 = vmatpush2.msra.mxu0 0.0
          %1393 = vmatprep.subr.mxu0 0.0
          %1394 = vmatpush2.msra.mxu0 0.0
          %1395 = vmatprep.subr.mxu0 0.0
          %1396 = vmatpush2.msra.mxu0 0.0
          %1397 = vmatprep.subr.mxu0 0.0
          %1398 = vmatpush2.msra.mxu0 0.0
          %1399 = vmatprep.subr.mxu0 0.0
          %1400 = vmatpush2.msra.mxu0 0.0
          %1401 = vmatprep.subr.mxu0 0.0
          %1402 = vmatpush2.msra.mxu0 0.0
          %1403 = vmatprep.subr.mxu0 0.0
          %1404 = vmatpush2.msra.mxu0 0.0
          %1405 = vmatprep.subr.mxu0 0.0
          %1406 = vmatpush2.msra.mxu0 0.0
          %1407 = vmatprep.subr.mxu0 0.0
          %1408 = vmatpush2.msra.mxu0 0.0
          %1409 = vmatprep.subr.mxu0 0.0
          %1410 = vmatpush2.msra.mxu0 0.0
          %1411 = vmatprep.subr.mxu0 0.0
          %1412 = vmatpush2.msra.mxu0 0.0
          %1413 = vmatprep.subr.mxu0 0.0
          %1414 = vmatpush2.msra.mxu0 0.0
          %1415 = vmatprep.mubr.f32.mxu0 0.0
          %1416 = vmatmul.mubr.f32.gmra.mxu0 %v1085
          %v1417 = vpop.f32.mrf.mxu0
          %v1418 = vadd.f32 0.0, %v1417
          %v1419 = vpop.f32.mrf.mxu0
          %1420 = vmatprep.mubr.f32.mxu0 0.0
          %1421 = vmatmul.mubr.f32.gmra.mxu0 %v1088
          %v1422 = vpop.f32.mrf.mxu0
          %v1423 = vadd.f32 0.0, %v1422
          %v1424 = vpop.f32.mrf.mxu0
          %1425 = vdwg.mxu0
          %v1426 = vmul.f32 %v1418, %v973
          %v1427 = vmul.f32 %v1423, %v1077
          %v1428 = vadd.f32 %v1341, %v1426
          %v1429 = vadd.f32 %v1342, %v1427
          %v1430 = vld [vmem:[%s9] sm:$0xff]
          %v1431 = vld [vmem:[%s9 + $0x8] sm:$0xff]
          %v1432 = vld [vmem:[%s9 + $0x10] sm:$0xff]
          %v1433 = vld [vmem:[%s9 + $0x18] sm:$0xff]
          %v1434 = vld [vmem:[%s9 + $0x20] sm:$0x1]
          %v1436 = vsel %vm1090, %v1434, 0
          %1438 = vmatprep.subr.mxu0 0.0
          %1439 = vmatpush1.msra.mxu0 0.0
          %1440 = vmatprep.subr.mxu0 0.0
          %1441 = vmatpush1.msra.mxu0 0.0
          %1442 = vmatprep.subr.mxu0 0.0
          %1443 = vmatpush1.msra.mxu0 0.0
          %1444 = vmatprep.subr.mxu0 0.0
          %1445 = vmatpush1.msra.mxu0 0.0
          %1446 = vmatprep.subr.mxu0 0.0
          %1447 = vmatpush1.msra.mxu0 0.0
          %1448 = vmatprep.subr.mxu0 0.0
          %1449 = vmatpush1.msra.mxu0 0.0
          %1450 = vmatprep.subr.mxu0 0.0
          %1451 = vmatpush1.msra.mxu0 0.0
          %1452 = vmatprep.subr.mxu0 0.0
          %1453 = vmatpush1.msra.mxu0 0.0
          %1454 = vmatprep.subr.mxu0 0.0
          %1455 = vmatpush1.msra.mxu0 0.0
          %1456 = vmatprep.subr.mxu0 0.0
          %1457 = vmatpush1.msra.mxu0 0.0
          %1458 = vmatprep.subr.mxu0 0.0
          %1459 = vmatpush1.msra.mxu0 0.0
          %1460 = vmatprep.subr.mxu0 0.0
          %1461 = vmatpush1.msra.mxu0 %v1436
          %1462 = vmatprep.subr.mxu0 0.0
          %1463 = vmatpush1.msra.mxu0 %v1433
          %1464 = vmatprep.subr.mxu0 0.0
          %1465 = vmatpush1.msra.mxu0 %v1432
          %1466 = vmatprep.subr.mxu0 0.0
          %1467 = vmatpush1.msra.mxu0 %v1431
          %1468 = vmatprep.subr.mxu0 0.0
          %1469 = vmatpush1.msra.mxu0 %v1430
          %1470 = vmatprep.subr.mxu0 0.0
          %1471 = vmatpush2.msra.mxu0 0.0
          %1472 = vmatprep.subr.mxu0 0.0
          %1473 = vmatpush2.msra.mxu0 0.0
          %1474 = vmatprep.subr.mxu0 0.0
          %1475 = vmatpush2.msra.mxu0 0.0
          %1476 = vmatprep.subr.mxu0 0.0
          %1477 = vmatpush2.msra.mxu0 0.0
          %1478 = vmatprep.subr.mxu0 0.0
          %1479 = vmatpush2.msra.mxu0 0.0
          %1480 = vmatprep.subr.mxu0 0.0
          %1481 = vmatpush2.msra.mxu0 0.0
          %1482 = vmatprep.subr.mxu0 0.0
          %1483 = vmatpush2.msra.mxu0 0.0
          %1484 = vmatprep.subr.mxu0 0.0
          %1485 = vmatpush2.msra.mxu0 0.0
          %1486 = vmatprep.subr.mxu0 0.0
          %1487 = vmatpush2.msra.mxu0 0.0
          %1488 = vmatprep.subr.mxu0 0.0
          %1489 = vmatpush2.msra.mxu0 0.0
          %1490 = vmatprep.subr.mxu0 0.0
          %1491 = vmatpush2.msra.mxu0 0.0
          %1492 = vmatprep.subr.mxu0 0.0
          %1493 = vmatpush2.msra.mxu0 0.0
          %1494 = vmatprep.subr.mxu0 0.0
          %1495 = vmatpush2.msra.mxu0 0.0
          %1496 = vmatprep.subr.mxu0 0.0
          %1497 = vmatpush2.msra.mxu0 0.0
          %1498 = vmatprep.subr.mxu0 0.0
          %1499 = vmatpush2.msra.mxu0 0.0
          %1500 = vmatprep.subr.mxu0 0.0
          %1501 = vmatpush2.msra.mxu0 0.0
          %1502 = vmatprep.mubr.f32.mxu0 0.0
          %1503 = vmatmul.mubr.f32.gmra.mxu0 %v1085
          %v1504 = vpop.f32.mrf.mxu0
          %v1505 = vadd.f32 0.0, %v1504
          %v1506 = vpop.f32.mrf.mxu0
          %1507 = vmatprep.mubr.f32.mxu0 0.0
          %1508 = vmatmul.mubr.f32.gmra.mxu0 %v1088
          %v1509 = vpop.f32.mrf.mxu0
          %v1510 = vadd.f32 0.0, %v1509
          %v1511 = vpop.f32.mrf.mxu0
          %1512 = vdwg.mxu0
          %v1513 = vpack.c.bf16 %v1257, %v1256
          %v1515 = vunpack.c.l.b16 %v1513
          %v1516 = vunpack.c.h.b16 %v1513
          %v1517 = vpack.c.b16 %v1515, %v1515
          %v1518 = vpack.c.b16 %v1516, %v1516
          %vm1521 = vcmask 257024
          %1522 = vst.msk [vmem:[#allocation2] sm:$0xf] %vm1521, %v1517
          %1523 = vst.msk [vmem:[#allocation2 + $0x4] sm:$0xf] %vm1521, %v1518
          %1526 = vrot.lane.b32.xlu0 %v1505, 32
          %v1527 = vpop.permute.xlu0 %1526
          %1528 = vrot.lane.b32.xlu0 %v1510, 32
          %v1529 = vpop.permute.xlu0 %1528
          %vm1532 = vcmask 261120
          %v1533 = vsel %vm1532, %v1428, %v1527
          %v1534 = vsel %vm1532, %v1429, %v1529
          %v1535 = vpack.c.bf16 %v1534, %v1533
          %v1537 = vunpack.c.l.b16 %v1535
          %v1538 = vunpack.c.h.b16 %v1535
          %v1539 = vpack.c.b16 %v1537, %v1537
          %v1540 = vpack.c.b16 %v1538, %v1538
          %vm1543 = vcmask 519168
          %1544 = vst.msk [vmem:[#allocation3] sm:$0xf] %vm1543, %v1539
          %1545 = vst.msk [vmem:[#allocation3 + $0x4] sm:$0xf] %vm1543, %v1540
          %vm1546 = vcmask 785408
          %1547 = vst.msk [vmem:[#allocation4] sm:$0xff] %vm1546, 0.0
          %1548 = vst.msk [vmem:[#allocation4 + $0x8] sm:$0xff] %vm1546, 0.0
        $region84: #{tpu_custom_call.1} parent=79 // pred_fallthru
          _
        %v1549 = vld [vmem:[%s548] sm:$0xff]
        %v1550 = vld [vmem:[%s548 + $0x8] sm:$0xff]
        %v1551 = vld [vmem:[%s554] sm:$0xff]
        %v1552 = vld [vmem:[%s554 + $0x8] sm:$0xff]
        %v1553 = vlaneseq
        %v1554 = vand.u32 %v1553, 127
        %1555 = vset.pattern.permute.xlu0 0
        %1556 = vperm.xlu0 %1555, %v1549
        %v1557 = vpop.permute.xlu0 %1556
        %1558 = vset.pattern.permute.xlu0 0
        %1559 = vperm.xlu0 %1558, %v1550
        %v1560 = vpop.permute.xlu0 %1559
        %vm1561 = vcmp.eq.s32.totalorder %v1554, %v1557
        %vm1562 = vcmp.eq.s32.totalorder %v1554, %v1560
        %v1563 = vsel %vm1561, 1.0, 0.0
        %v1564 = vsel %vm1562, 1.0, 0.0
        %v1565 = vpack.c.bf16 %v1564, %v1563
        %1566 = vset.pattern.permute.xlu0 0
        %1567 = vperm.xlu0 %1566, %v1551
        %v1568 = vpop.permute.xlu0 %1567
        %1569 = vset.pattern.permute.xlu0 0
        %1570 = vperm.xlu0 %1569, %v1552
        %v1571 = vpop.permute.xlu0 %1570
        %vm1572 = vcmp.eq.s32.totalorder %v1554, %v1568
        %vm1573 = vcmp.eq.s32.totalorder %v1554, %v1571
        %v1574 = vsel %vm1572, 1.0, 0.0
        %v1575 = vsel %vm1573, 1.0, 0.0
        %v1576 = vpack.c.bf16 %v1575, %v1574
        %v1577 = vld [vmem:[#allocation3] sm:$0xf]
        %v1578 = vld [vmem:[#allocation3 + $0x4] sm:$0xf]
        %v1581 = vunpack.c.l.b16 %v1577
        %v1582 = vunpack.c.l.b16 %v1578
        %v1583 = vpack.c.b16 %v1582, %v1581
        %vm1585 = vcmask 130048
        %v1587 = vsel %vm1585, %v1565, 0
        %1589 = vmatprep.subr.bf16.mxu0 0
        %1590 = vmatpush1.bf16.msra.mxu0 0
        %1591 = vmatprep.subr.bf16.mxu0 0
        %1592 = vmatpush1.bf16.msra.mxu0 0
        %1593 = vmatprep.subr.bf16.mxu0 0
        %1594 = vmatpush1.bf16.msra.mxu0 0
        %1595 = vmatprep.subr.bf16.mxu0 0
        %1596 = vmatpush1.bf16.msra.mxu0 0
        %1597 = vmatprep.subr.bf16.mxu0 0
        %1598 = vmatpush1.bf16.msra.mxu0 0
        %1599 = vmatprep.subr.bf16.mxu0 0
        %1600 = vmatpush1.bf16.msra.mxu0 0
        %1601 = vmatprep.subr.bf16.mxu0 0
        %1602 = vmatpush1.bf16.msra.mxu0 0
        %1603 = vmatprep.subr.bf16.mxu0 0
        %1604 = vmatpush1.bf16.msra.mxu0 %v1583
        %1605 = vmatprep.subr.bf16.mxu0 0
        %1606 = vmatpush2.bf16.msra.mxu0 0
        %1607 = vmatprep.subr.bf16.mxu0 0
        %1608 = vmatpush2.bf16.msra.mxu0 0
        %1609 = vmatprep.subr.bf16.mxu0 0
        %1610 = vmatpush2.bf16.msra.mxu0 0
        %1611 = vmatprep.subr.bf16.mxu0 0
        %1612 = vmatpush2.bf16.msra.mxu0 0
        %1613 = vmatprep.subr.bf16.mxu0 0
        %1614 = vmatpush2.bf16.msra.mxu0 0
        %1615 = vmatprep.subr.bf16.mxu0 0
        %1616 = vmatpush2.bf16.msra.mxu0 0
        %1617 = vmatprep.subr.bf16.mxu0 0
        %1618 = vmatpush2.bf16.msra.mxu0 0
        %1619 = vmatprep.subr.bf16.mxu0 0
        %1620 = vmatpush2.bf16.msra.mxu0 0
        %1621 = vmatprep.mubr.bf16.mxu0 0
        %1622 = vmatmul.mubr.bf16.gmra.mxu0 %v1587
        %v1623 = vpop.f32.mrf.mxu0
        %v1624 = vadd.f32 0.0, %v1623
        %v1625 = vpop.f32.mrf.mxu0
        %v1626 = vpop.f32.mrf.mxu0
        %v1627 = vadd.f32 0.0, %v1626
        %v1628 = vpop.f32.mrf.mxu0
        %1629 = vdwg.mxu0
        %v1630 = vld [vmem:[#allocation2] sm:$0xf]
        %v1631 = vld [vmem:[#allocation2 + $0x4] sm:$0xf]
        %v1634 = vunpack.c.l.b16 %v1630
        %v1635 = vunpack.c.l.b16 %v1631
        %v1636 = vpack.c.b16 %v1635, %v1634
        %v1639 = vsel %vm1585, %v1576, 0
        %1641 = vmatprep.subr.bf16.mxu0 0
        %1642 = vmatpush1.bf16.msra.mxu0 0
        %1643 = vmatprep.subr.bf16.mxu0 0
        %1644 = vmatpush1.bf16.msra.mxu0 0
        %1645 = vmatprep.subr.bf16.mxu0 0
        %1646 = vmatpush1.bf16.msra.mxu0 0
        %1647 = vmatprep.subr.bf16.mxu0 0
        %1648 = vmatpush1.bf16.msra.mxu0 0
        %1649 = vmatprep.subr.bf16.mxu0 0
        %1650 = vmatpush1.bf16.msra.mxu0 0
        %1651 = vmatprep.subr.bf16.mxu0 0
        %1652 = vmatpush1.bf16.msra.mxu0 0
        %1653 = vmatprep.subr.bf16.mxu0 0
        %1654 = vmatpush1.bf16.msra.mxu0 0
        %1655 = vmatprep.subr.bf16.mxu0 0
        %1656 = vmatpush1.bf16.msra.mxu0 %v1636
        %1657 = vmatprep.subr.bf16.mxu0 0
        %1658 = vmatpush2.bf16.msra.mxu0 0
        %1659 = vmatprep.subr.bf16.mxu0 0
        %1660 = vmatpush2.bf16.msra.mxu0 0
        %1661 = vmatprep.subr.bf16.mxu0 0
        %1662 = vmatpush2.bf16.msra.mxu0 0
        %1663 = vmatprep.subr.bf16.mxu0 0
        %1664 = vmatpush2.bf16.msra.mxu0 0
        %1665 = vmatprep.subr.bf16.mxu0 0
        %1666 = vmatpush2.bf16.msra.mxu0 0
        %1667 = vmatprep.subr.bf16.mxu0 0
        %1668 = vmatpush2.bf16.msra.mxu0 0
        %1669 = vmatprep.subr.bf16.mxu0 0
        %1670 = vmatpush2.bf16.msra.mxu0 0
        %1671 = vmatprep.subr.bf16.mxu0 0
        %1672 = vmatpush2.bf16.msra.mxu0 0
        %1673 = vmatprep.mubr.bf16.mxu0 0
        %1674 = vmatmul.mubr.bf16.gmra.mxu0 %v1639
        %v1675 = vpop.f32.mrf.mxu0
        %v1676 = vadd.f32 0.0, %v1675
        %v1677 = vpop.f32.mrf.mxu0
        %v1678 = vpop.f32.mrf.mxu0
        %v1679 = vadd.f32 0.0, %v1678
        %v1680 = vpop.f32.mrf.mxu0
        %1681 = vdwg.mxu0
        %v1682 = vld [vmem:[%s560] sm:$0xff]
        %v1683 = vld [vmem:[%s560 + $0x8] sm:$0xff]
        %v1684 = vld [vmem:[%s11] sm:$0xff]
        %v1685 = vld [vmem:[%s11 + $0x8] sm:$0xff]
        %v1686 = vld [vmem:[%s11 + $0x10] sm:$0xff]
        %v1687 = vld [vmem:[%s11 + $0x18] sm:$0xff]
        %v1688 = vld [vmem:[%s11 + $0x20] sm:$0x1]
        %vm1689 = vcmask 269312
        %v1691 = vsel %vm1689, %v1682, 0
        %v1694 = vsel %vm1689, %v1683, 0
        %vm1696 = vcmask 1040384
        %v1698 = vsel %vm1696, %v1688, 0
        %1700 = vmatprep.subr.mxu0 0.0
        %1701 = vmatpush1.msra.mxu0 0.0
        %1702 = vmatprep.subr.mxu0 0.0
        %1703 = vmatpush1.msra.mxu0 0.0
        %1704 = vmatprep.subr.mxu0 0.0
        %1705 = vmatpush1.msra.mxu0 0.0
        %1706 = vmatprep.subr.mxu0 0.0
        %1707 = vmatpush1.msra.mxu0 0.0
        %1708 = vmatprep.subr.mxu0 0.0
        %1709 = vmatpush1.msra.mxu0 0.0
        %1710 = vmatprep.subr.mxu0 0.0
        %1711 = vmatpush1.msra.mxu0 0.0
        %1712 = vmatprep.subr.mxu0 0.0
        %1713 = vmatpush1.msra.mxu0 0.0
        %1714 = vmatprep.subr.mxu0 0.0
        %1715 = vmatpush1.msra.mxu0 0.0
        %1716 = vmatprep.subr.mxu0 0.0
        %1717 = vmatpush1.msra.mxu0 0.0
        %1718 = vmatprep.subr.mxu0 0.0
        %1719 = vmatpush1.msra.mxu0 0.0
        %1720 = vmatprep.subr.mxu0 0.0
        %1721 = vmatpush1.msra.mxu0 0.0
        %1722 = vmatprep.subr.mxu0 0.0
        %1723 = vmatpush1.msra.mxu0 %v1698
        %1724 = vmatprep.subr.mxu0 0.0
        %1725 = vmatpush1.msra.mxu0 %v1687
        %1726 = vmatprep.subr.mxu0 0.0
        %1727 = vmatpush1.msra.mxu0 %v1686
        %1728 = vmatprep.subr.mxu0 0.0
        %1729 = vmatpush1.msra.mxu0 %v1685
        %1730 = vmatprep.subr.mxu0 0.0
        %1731 = vmatpush1.msra.mxu0 %v1684
        %1732 = vmatprep.subr.mxu0 0.0
        %1733 = vmatpush2.msra.mxu0 0.0
        %1734 = vmatprep.subr.mxu0 0.0
        %1735 = vmatpush2.msra.mxu0 0.0
        %1736 = vmatprep.subr.mxu0 0.0
        %1737 = vmatpush2.msra.mxu0 0.0
        %1738 = vmatprep.subr.mxu0 0.0
        %1739 = vmatpush2.msra.mxu0 0.0
        %1740 = vmatprep.subr.mxu0 0.0
        %1741 = vmatpush2.msra.mxu0 0.0
        %1742 = vmatprep.subr.mxu0 0.0
        %1743 = vmatpush2.msra.mxu0 0.0
        %1744 = vmatprep.subr.mxu0 0.0
        %1745 = vmatpush2.msra.mxu0 0.0
        %1746 = vmatprep.subr.mxu0 0.0
        %1747 = vmatpush2.msra.mxu0 0.0
        %1748 = vmatprep.subr.mxu0 0.0
        %1749 = vmatpush2.msra.mxu0 0.0
        %1750 = vmatprep.subr.mxu0 0.0
        %1751 = vmatpush2.msra.mxu0 0.0
        %1752 = vmatprep.subr.mxu0 0.0
        %1753 = vmatpush2.msra.mxu0 0.0
        %1754 = vmatprep.subr.mxu0 0.0
        %1755 = vmatpush2.msra.mxu0 0.0
        %1756 = vmatprep.subr.mxu0 0.0
        %1757 = vmatpush2.msra.mxu0 0.0
        %1758 = vmatprep.subr.mxu0 0.0
        %1759 = vmatpush2.msra.mxu0 0.0
        %1760 = vmatprep.subr.mxu0 0.0
        %1761 = vmatpush2.msra.mxu0 0.0
        %1762 = vmatprep.subr.mxu0 0.0
        %1763 = vmatpush2.msra.mxu0 0.0
        %1764 = vmatprep.mubr.f32.mxu0 0.0
        %1765 = vmatmul.mubr.f32.gmra.mxu0 %v1691
        %v1766 = vpop.f32.mrf.mxu0
        %v1767 = vadd.f32 0.0, %v1766
        %v1768 = vpop.f32.mrf.mxu0
        %1769 = vmatprep.mubr.f32.mxu0 0.0
        %1770 = vmatmul.mubr.f32.gmra.mxu0 %v1694
        %v1771 = vpop.f32.mrf.mxu0
        %v1772 = vadd.f32 0.0, %v1771
        %v1773 = vpop.f32.mrf.mxu0
        %1774 = vdwg.mxu0
        %v1775 = vld [vmem:[%s12] sm:$0xff]
        %v1776 = vld [vmem:[%s12 + $0x8] sm:$0xff]
        %v1777 = vld [vmem:[%s12 + $0x10] sm:$0xff]
        %v1778 = vld [vmem:[%s12 + $0x18] sm:$0xff]
        %v1779 = vld [vmem:[%s12 + $0x20] sm:$0x1]
        %v1781 = vsel %vm1696, %v1779, 0
        %1783 = vmatprep.subr.mxu0 0.0
        %1784 = vmatpush1.msra.mxu0 0.0
        %1785 = vmatprep.subr.mxu0 0.0
        %1786 = vmatpush1.msra.mxu0 0.0
        %1787 = vmatprep.subr.mxu0 0.0
        %1788 = vmatpush1.msra.mxu0 0.0
        %1789 = vmatprep.subr.mxu0 0.0
        %1790 = vmatpush1.msra.mxu0 0.0
        %1791 = vmatprep.subr.mxu0 0.0
        %1792 = vmatpush1.msra.mxu0 0.0
        %1793 = vmatprep.subr.mxu0 0.0
        %1794 = vmatpush1.msra.mxu0 0.0
        %1795 = vmatprep.subr.mxu0 0.0
        %1796 = vmatpush1.msra.mxu0 0.0
        %1797 = vmatprep.subr.mxu0 0.0
        %1798 = vmatpush1.msra.mxu0 0.0
        %1799 = vmatprep.subr.mxu0 0.0
        %1800 = vmatpush1.msra.mxu0 0.0
        %1801 = vmatprep.subr.mxu0 0.0
        %1802 = vmatpush1.msra.mxu0 0.0
        %1803 = vmatprep.subr.mxu0 0.0
        %1804 = vmatpush1.msra.mxu0 0.0
        %1805 = vmatprep.subr.mxu0 0.0
        %1806 = vmatpush1.msra.mxu0 %v1781
        %1807 = vmatprep.subr.mxu0 0.0
        %1808 = vmatpush1.msra.mxu0 %v1778
        %1809 = vmatprep.subr.mxu0 0.0
        %1810 = vmatpush1.msra.mxu0 %v1777
        %1811 = vmatprep.subr.mxu0 0.0
        %1812 = vmatpush1.msra.mxu0 %v1776
        %1813 = vmatprep.subr.mxu0 0.0
        %1814 = vmatpush1.msra.mxu0 %v1775
        %1815 = vmatprep.subr.mxu0 0.0
        %1816 = vmatpush2.msra.mxu0 0.0
        %1817 = vmatprep.subr.mxu0 0.0
        %1818 = vmatpush2.msra.mxu0 0.0
        %1819 = vmatprep.subr.mxu0 0.0
        %1820 = vmatpush2.msra.mxu0 0.0
        %1821 = vmatprep.subr.mxu0 0.0
        %1822 = vmatpush2.msra.mxu0 0.0
        %1823 = vmatprep.subr.mxu0 0.0
        %1824 = vmatpush2.msra.mxu0 0.0
        %1825 = vmatprep.subr.mxu0 0.0
        %1826 = vmatpush2.msra.mxu0 0.0
        %1827 = vmatprep.subr.mxu0 0.0
        %1828 = vmatpush2.msra.mxu0 0.0
        %1829 = vmatprep.subr.mxu0 0.0
        %1830 = vmatpush2.msra.mxu0 0.0
        %1831 = vmatprep.subr.mxu0 0.0
        %1832 = vmatpush2.msra.mxu0 0.0
        %1833 = vmatprep.subr.mxu0 0.0
        %1834 = vmatpush2.msra.mxu0 0.0
        %1835 = vmatprep.subr.mxu0 0.0
        %1836 = vmatpush2.msra.mxu0 0.0
        %1837 = vmatprep.subr.mxu0 0.0
        %1838 = vmatpush2.msra.mxu0 0.0
        %1839 = vmatprep.subr.mxu0 0.0
        %1840 = vmatpush2.msra.mxu0 0.0
        %1841 = vmatprep.subr.mxu0 0.0
        %1842 = vmatpush2.msra.mxu0 0.0
        %1843 = vmatprep.subr.mxu0 0.0
        %1844 = vmatpush2.msra.mxu0 0.0
        %1845 = vmatprep.subr.mxu0 0.0
        %1846 = vmatpush2.msra.mxu0 0.0
        %1847 = vmatprep.mubr.f32.mxu0 0.0
        %1848 = vmatmul.mubr.f32.gmra.mxu0 %v1691
        %v1849 = vpop.f32.mrf.mxu0
        %v1850 = vadd.f32 0.0, %v1849
        %v1851 = vpop.f32.mrf.mxu0
        %1852 = vmatprep.mubr.f32.mxu0 0.0
        %1853 = vmatmul.mubr.f32.gmra.mxu0 %v1694
        %v1854 = vpop.f32.mrf.mxu0
        %v1855 = vadd.f32 0.0, %v1854
        %v1856 = vpop.f32.mrf.mxu0
        %1857 = vdwg.mxu0
        %v1858 = vmul.f32 %v1624, %v1676
        %v1859 = vmul.f32 %v1627, %v1679
        %v1860 = vld [vmem:[%s13] sm:$0xff]
        %v1861 = vld [vmem:[%s13 + $0x8] sm:$0xff]
        %v1862 = vld [vmem:[%s13 + $0x10] sm:$0xff]
        %v1863 = vld [vmem:[%s13 + $0x18] sm:$0xff]
        %vm1864 = vcmask 261120
        %v1866 = vsel %vm1864, %v1858, 0
        %v1869 = vsel %vm1864, %v1859, 0
        %1871 = vmatprep.subr.mxu0 0.0
        %1872 = vmatpush1.msra.mxu0 0.0
        %1873 = vmatprep.subr.mxu0 0.0
        %1874 = vmatpush1.msra.mxu0 0.0
        %1875 = vmatprep.subr.mxu0 0.0
        %1876 = vmatpush1.msra.mxu0 0.0
        %1877 = vmatprep.subr.mxu0 0.0
        %1878 = vmatpush1.msra.mxu0 0.0
        %1879 = vmatprep.subr.mxu0 0.0
        %1880 = vmatpush1.msra.mxu0 0.0
        %1881 = vmatprep.subr.mxu0 0.0
        %1882 = vmatpush1.msra.mxu0 0.0
        %1883 = vmatprep.subr.mxu0 0.0
        %1884 = vmatpush1.msra.mxu0 0.0
        %1885 = vmatprep.subr.mxu0 0.0
        %1886 = vmatpush1.msra.mxu0 0.0
        %1887 = vmatprep.subr.mxu0 0.0
        %1888 = vmatpush1.msra.mxu0 0.0
        %1889 = vmatprep.subr.mxu0 0.0
        %1890 = vmatpush1.msra.mxu0 0.0
        %1891 = vmatprep.subr.mxu0 0.0
        %1892 = vmatpush1.msra.mxu0 0.0
        %1893 = vmatprep.subr.mxu0 0.0
        %1894 = vmatpush1.msra.mxu0 0.0
        %1895 = vmatprep.subr.mxu0 0.0
        %1896 = vmatpush1.msra.mxu0 %v1863
        %1897 = vmatprep.subr.mxu0 0.0
        %1898 = vmatpush1.msra.mxu0 %v1862
        %1899 = vmatprep.subr.mxu0 0.0
        %1900 = vmatpush1.msra.mxu0 %v1861
        %1901 = vmatprep.subr.mxu0 0.0
        %1902 = vmatpush1.msra.mxu0 %v1860
        %1903 = vmatprep.subr.mxu0 0.0
        %1904 = vmatpush2.msra.mxu0 0.0
        %1905 = vmatprep.subr.mxu0 0.0
        %1906 = vmatpush2.msra.mxu0 0.0
        %1907 = vmatprep.subr.mxu0 0.0
        %1908 = vmatpush2.msra.mxu0 0.0
        %1909 = vmatprep.subr.mxu0 0.0
        %1910 = vmatpush2.msra.mxu0 0.0
        %1911 = vmatprep.subr.mxu0 0.0
        %1912 = vmatpush2.msra.mxu0 0.0
        %1913 = vmatprep.subr.mxu0 0.0
        %1914 = vmatpush2.msra.mxu0 0.0
        %1915 = vmatprep.subr.mxu0 0.0
        %1916 = vmatpush2.msra.mxu0 0.0
        %1917 = vmatprep.subr.mxu0 0.0
        %1918 = vmatpush2.msra.mxu0 0.0
        %1919 = vmatprep.subr.mxu0 0.0
        %1920 = vmatpush2.msra.mxu0 0.0
        %1921 = vmatprep.subr.mxu0 0.0
        %1922 = vmatpush2.msra.mxu0 0.0
        %1923 = vmatprep.subr.mxu0 0.0
        %1924 = vmatpush2.msra.mxu0 0.0
        %1925 = vmatprep.subr.mxu0 0.0
        %1926 = vmatpush2.msra.mxu0 0.0
        %1927 = vmatprep.subr.mxu0 0.0
        %1928 = vmatpush2.msra.mxu0 0.0
        %1929 = vmatprep.subr.mxu0 0.0
        %1930 = vmatpush2.msra.mxu0 0.0
        %1931 = vmatprep.subr.mxu0 0.0
        %1932 = vmatpush2.msra.mxu0 0.0
        %1933 = vmatprep.subr.mxu0 0.0
        %1934 = vmatpush2.msra.mxu0 0.0
        %1935 = vmatprep.mubr.f32.mxu0 0.0
        %1936 = vmatmul.mubr.f32.gmra.mxu0 %v1866
        %v1937 = vpop.f32.mrf.mxu0
        %v1938 = vadd.f32 %v1850, %v1937
        %v1939 = vpop.f32.mrf.mxu0
        %1940 = vmatprep.mubr.f32.mxu0 0.0
        %1941 = vmatmul.mubr.f32.gmra.mxu0 %v1869
        %v1942 = vpop.f32.mrf.mxu0
        %v1943 = vadd.f32 %v1855, %v1942
        %v1944 = vpop.f32.mrf.mxu0
        %1945 = vdwg.mxu0
        %v1946 = vmax.f32 %v1938, -5.0
        %v1947 = vmax.f32 %v1943, -5.0
        %v1948 = vmin.f32 %v1946, 5.0
        %v1949 = vmin.f32 %v1947, 5.0
        %v1950 = vmul.f32 %v1767, %v1948
        %v1951 = vmul.f32 %v1772, %v1949
        %1952 = vst.msk [vmem:[%s566] sm:$0xff] %vm1864, %v1950
        %1953 = vst.msk [vmem:[%s566 + $0x8] sm:$0xff] %vm1864, %v1951
        %v1954 = vsub.f32 %v1948, 5.0
        %v1955 = vsub.f32 %v1949, 5.0
        %v1956 = vmul.f32 %v1954, 1.442695
        %v1957 = vpow.pop %v1956
        %v1958 = vmul.f32 %v1955, 1.442695
        %v1959 = vpow.pop %v1958
        %1962 = vrot.lane.b32.xlu0 %v1957, 32
        %v1963 = vpop.permute.xlu0 %1962
        %1964 = vrot.lane.b32.xlu0 %v1959, 32
        %v1965 = vpop.permute.xlu0 %1964
        %v1968 = vmul.f32 %v1624, %v1963
        %v1969 = vmul.f32 %v1627, %v1965
        %v1970 = vmul.f32 %v1938, %v1957
        %v1971 = vmul.f32 %v1943, %v1959
        %1974 = vrot.lane.b32.xlu0 %v1970, 64
        %v1975 = vpop.permute.xlu0 %1974
        %1976 = vrot.lane.b32.xlu0 %v1971, 64
        %v1977 = vpop.permute.xlu0 %1976
        %v1980 = vsel %vm1864, %v1957, %v1968
        %v1981 = vsel %vm1864, %v1959, %v1969
        %vm1982 = vcmask 523264
        %v1983 = vsel %vm1982, %v1980, %v1975
        %v1984 = vsel %vm1982, %v1981, %v1977
        %v1985 = vpack.c.bf16 %v1984, %v1983
        %v1986 = vld [vmem:[#allocation4] sm:$0xff]
        %v1987 = vld [vmem:[#allocation4 + $0x8] sm:$0xff]
        %1988 = vxpose.xlu0.c.b16.start [1/8] %v1576, 128
        %1989 = vxpose.xlu0.c.b16.cont [2/8] 0, 128
        %1990 = vxpose.xlu0.c.b16.cont [3/8] 0, 128
        %1991 = vxpose.xlu0.c.b16.cont [4/8] 0, 128
        %1992 = vxpose.xlu0.c.b16.cont [5/8] 0, 128
        %1993 = vxpose.xlu0.c.b16.cont [6/8] 0, 128
        %1994 = vxpose.xlu0.c.b16.cont [7/8] 0, 128
        %1995 = vxpose.xlu0.c.b16.end [8/8] 0, 128
        %v1996 = vpop.trf.xlu0
        %v1997 = vpop.trf.xlu0
        %v1998 = vpop.trf.xlu0
        %v1999 = vpop.trf.xlu0
        %v2000 = vpop.trf.xlu0
        %v2001 = vpop.trf.xlu0
        %v2002 = vpop.trf.xlu0
        %v2003 = vpop.trf.xlu0
        %v2005 = vsel %vm1585, %v1996, 0
        %2007 = vmatprep.subr.bf16.mxu0 0
        %2008 = vmatpush1.bf16.msra.mxu0 0
        %2009 = vmatprep.subr.bf16.mxu0 0
        %2010 = vmatpush1.bf16.msra.mxu0 0
        %2011 = vmatprep.subr.bf16.mxu0 0
        %2012 = vmatpush1.bf16.msra.mxu0 0
        %2013 = vmatprep.subr.bf16.mxu0 0
        %2014 = vmatpush1.bf16.msra.mxu0 0
        %2015 = vmatprep.subr.bf16.mxu0 0
        %2016 = vmatpush1.bf16.msra.mxu0 0
        %2017 = vmatprep.subr.bf16.mxu0 0
        %2018 = vmatpush1.bf16.msra.mxu0 0
        %2019 = vmatprep.subr.bf16.mxu0 0
        %2020 = vmatpush1.bf16.msra.mxu0 0
        %2021 = vmatprep.subr.bf16.mxu0 0
        %2022 = vmatpush1.bf16.msra.mxu0 %v1985
        %2023 = vmatprep.subr.bf16.mxu0 0
        %2024 = vmatpush2.bf16.msra.mxu0 0
        %2025 = vmatprep.subr.bf16.mxu0 0
        %2026 = vmatpush2.bf16.msra.mxu0 0
        %2027 = vmatprep.subr.bf16.mxu0 0
        %2028 = vmatpush2.bf16.msra.mxu0 0
        %2029 = vmatprep.subr.bf16.mxu0 0
        %2030 = vmatpush2.bf16.msra.mxu0 0
        %2031 = vmatprep.subr.bf16.mxu0 0
        %2032 = vmatpush2.bf16.msra.mxu0 0
        %2033 = vmatprep.subr.bf16.mxu0 0
        %2034 = vmatpush2.bf16.msra.mxu0 0
        %2035 = vmatprep.subr.bf16.mxu0 0
        %2036 = vmatpush2.bf16.msra.mxu0 0
        %2037 = vmatprep.subr.bf16.mxu0 0
        %2038 = vmatpush2.bf16.msra.mxu0 0
        %2039 = vmatprep.mubr.bf16.mxu0 0
        %2040 = vmatmul.mubr.bf16.gmra.mxu0 %v2005
        %v2041 = vpop.f32.mrf.mxu0
        %v2042 = vadd.f32 0.0, %v2041
        %v2043 = vpop.f32.mrf.mxu0
        %v2044 = vpop.f32.mrf.mxu0
        %v2045 = vadd.f32 0.0, %v2044
        %v2046 = vpop.f32.mrf.mxu0
        %2047 = vdwg.mxu0
        %v2048 = vadd.f32 %v1986, %v2042
        %v2049 = vadd.f32 %v1987, %v2045
        %vm2050 = vcmask 785408
        %2051 = vst.msk [vmem:[#allocation4] sm:$0xff] %vm2050, %v2048
        %2052 = vst.msk [vmem:[#allocation4 + $0x8] sm:$0xff] %vm2050, %v2049
        %p2053 = scmp.eq.s32.totalorder %s29, 2
        // Predicated region
        $region85: #{tpu_custom_call.1} parent=79 // pred_check
          %p2054 = pneg %p2053
        $region86: #{tpu_custom_call.1} parent=79 // pred_check_branch
          %2056 = sbr.rel (%p2054) target = $region88
        $region87: #{tpu_custom_call.1} parent=79 // pred_region
          %v2057 = vld [vmem:[#allocation4] sm:$0xff]
          %v2058 = vld [vmem:[#allocation4 + $0x8] sm:$0xff]
          %v2059 = vadd.f32 %v2057, 1e-16
          %v2060 = vadd.f32 %v2058, 1e-16
          %v2061 = vrcp.pop %v2059
          %v2062 = vmul.f32 1.0, %v2061
          %v2063 = vrcp.pop %v2060
          %v2064 = vmul.f32 1.0, %v2063
          %v2065 = vld [vmem:[%s14] sm:$0x1]
          %v2067 = vlaneseq
          %v2068 = vshrl.u32 %v2067, 7
          %v2069 = vsub.s32 0, %v2068
          %v2070 = vrot.slane %v2065, %v2069
          %2071 = vrot.lane.b32.xlu0 %v2070, 64
          %v2072 = vpop.permute.xlu0 %2071
          %v2074 = vmul.f32 %v2057, %v2072
          %v2075 = vmul.f32 %v2058, %v2072
          %2078 = vrot.lane.b32.xlu0 %v2074, 96
          %v2079 = vpop.permute.xlu0 %2078
          %2080 = vrot.lane.b32.xlu0 %v2075, 96
          %v2081 = vpop.permute.xlu0 %2080
          %v2084 = vadd.f32 %v2057, %v2079
          %v2085 = vadd.f32 %v2058, %v2081
          %2088 = vrot.lane.b32.xlu0 %v2062, 32
          %v2089 = vpop.permute.xlu0 %2088
          %2090 = vrot.lane.b32.xlu0 %v2064, 32
          %v2091 = vpop.permute.xlu0 %2090
          %v2094 = vmul.f32 %v2084, %v2089
          %v2095 = vmul.f32 %v2085, %v2091
          %2098 = vrot.lane.b32.xlu0 %v2094, 96
          %v2099 = vpop.permute.xlu0 %2098
          %2100 = vrot.lane.b32.xlu0 %v2095, 96
          %v2101 = vpop.permute.xlu0 %2100
          %2104 = vst.msk [vmem:[#allocation5] sm:$0xff] %vm1864, %v2099
          %2105 = vst.msk [vmem:[#allocation5 + $0x8] sm:$0xff] %vm1864, %v2101
        $region88: #{tpu_custom_call.1} parent=79 // pred_fallthru
          _
        %s2106 = smul.u32 2, %s29
        %p2107 = scmp.lt.s32.totalorder %s2106, 5
        %s2108 = scalar_select %p2107, %s2106, 5
        %s2109 = smul.addr %s2108, 8
        %s2110 = scalar_lea.vmem %s16, %s2109
        // Predicated region
        $region89: #{tpu_custom_call.1} parent=79 // pred_check
          %p2111 = pneg %p372
        $region90: #{tpu_custom_call.1} parent=79 // pred_check_branch
          %2113 = sbr.rel (%p2111) target = $region92
        $region91: #{tpu_custom_call.1} parent=79 // pred_region
          %s2115 = ssub.s32 256, 256
          %2116 = vsyncadd [#allocation6], %s2115
          %s2117 = sshll.u32 [#allocation5], 4
          %s2118 = int_to_ptr.vmem [resolvable:$true] %s2117
          %2123 = dma.vmem_to_hbm [thread:$0]  %s2118, 256, %s15, [#allocation6], 128, 128, 8
        $region92: #{tpu_custom_call.1} parent=79 // pred_fallthru
          _
        // Predicated region
        $region93: #{tpu_custom_call.1} parent=79 // pred_check
          %p2124 = pneg %p398
        $region94: #{tpu_custom_call.1} parent=79 // pred_check_branch
          %2126 = sbr.rel (%p2124) target = $region96
        $region95: #{tpu_custom_call.1} parent=79 // pred_region
          %s2127 = smul.u32 2, %s29
        $region96: #{tpu_custom_call.1} parent=79 // pred_fallthru
          _
        // Predicated region
        $region97: #{tpu_custom_call.1} parent=79 // pred_check
          %p2128 = pneg %p372
        $region98: #{tpu_custom_call.1} parent=79 // pred_check_branch
          %2130 = sbr.rel (%p2128) target = $region100
        $region99: #{tpu_custom_call.1} parent=79 // pred_region
          %2131 = dma.done [#allocation6], 256
        $region100: #{tpu_custom_call.1} parent=79 // pred_fallthru
          _
      $region80: #{tpu_custom_call.1} parent=5 // pred_fallthru
        _
      %p2132 = scmp.le.s32.totalorder 2, %s24
      // Predicated region
      $region101: #{tpu_custom_call.1} parent=5 // pred_check
        %p2133 = pneg %p2132
      $region102: #{tpu_custom_call.1} parent=5 // pred_check_branch
        %2135 = sbr.rel (%p2133) target = $region104
      $region103: #{tpu_custom_call.1} parent=5 // pred_region
        %s2136 = ssub.s32 %s24, 2
        // Predicated region
        $region105: #{tpu_custom_call.1} parent=103 // pred_check
          %p2137 = pneg %p404
        $region106: #{tpu_custom_call.1} parent=103 // pred_check_branch
          %2139 = sbr.rel (%p2137) target = $region108
        $region107: #{tpu_custom_call.1} parent=103 // pred_region
          %s2140 = smul.u32 2, %s30
          %p2141 = scmp.lt.s32.totalorder %s2140, 5
          %s2142 = scalar_select %p2141, %s2140, 5
          %s2143 = smul.addr %s2142, 8
          %s2144 = scalar_lea.vmem %s16, %s2143
        $region108: #{tpu_custom_call.1} parent=103 // pred_fallthru
          _
      $region104: #{tpu_custom_call.1} parent=5 // pred_fallthru
        _
    $region6: #{tpu_custom_call.1} parent=1 // loop_footer
      %s28 = sadd.s32 1, %s24
    $region7: #{tpu_custom_call.1} parent=1 // loop_footer_branch
      %23 = sbr.rel target = $region3
    $region8: #{tpu_custom_call.1} parent=1 // loop_exit
      _
    %2145 = vsyncpa [#allocation6], 1
    %s2146 = scalar_lea.sflag [#allocation6], 1
    %2147 = vsyncpa %s2146, 1

</llo_original>
